<compile_context>
chip_gen: v6e
topology: v6e:2x2x1
jax: 0.10.0
libtpu: 0.0.40
codegen_flags: <defaults>
</compile_context>

<pallas_src>
import functools

import jax
import jax.numpy as jnp
from jax.experimental import pallas as pl
from jax.experimental.pallas import tpu as pltpu


_LANE = 128
_SUBLANE = 8


# ----------------------------------------------------------------------------
# Fused Pallas kernel: GIN x L -> mean pool -> LayerNorm -> +prompt -> head
# ----------------------------------------------------------------------------
def _fused_kernel(adj_ref, x_ref, pool_ref, w1s_ref, w2s_ref, vec_ref,
                  pw1_ref, pw2_ref, out_ref, *, num_layers, true_hid, fp, hp,
                  chunk):
    # vec_ref is a (1, n_vec*chunk) f32 slab; every small vector lives in its
    # own 128-aligned lane chunk -> perfectly aligned (1, width) loads.
    def vec(idx, width):
        c0 = idx * chunk
        return vec_ref[:, c0:c0 + width]

    h = x_ref[...]                                      # f32 [NP, FP]

    # GIN conv layers (unrolled: num_layers is a small static constant).
    # adj_ref is re-read at the dot site each layer (no long live range).
    for l in range(num_layers):
        agg = jnp.dot(adj_ref[...], h.astype(jnp.bfloat16),
                      preferred_element_type=jnp.float32)
        z = jnp.dot(agg.astype(jnp.bfloat16), w1s_ref[l],
                    preferred_element_type=jnp.float32) + vec(2 * l, fp)
        z = jnp.maximum(z, 0.0)
        z = jnp.dot(z.astype(jnp.bfloat16), w2s_ref[l],
                    preferred_element_type=jnp.float32) + vec(2 * l + 1, fp)
        h = jnp.maximum(z, 0.0)

    # Mean graph pooling (bf16 MXU operands, f32 accumulation; 1/n weights
    # are exact or near-exact in bf16).
    g = jnp.dot(pool_ref[...], h.astype(jnp.bfloat16),
                preferred_element_type=jnp.float32)     # f32 [GP, FP]

    base = 2 * num_layers
    gamma = vec(base + 0, fp)
    beta = vec(base + 1, fp)
    prompt = vec(base + 2, fp)
    pb1 = vec(base + 3, hp)
    pb2 = vec(base + 4, hp)

    # LayerNorm over the TRUE hidden dim. Padded lanes of g are exactly 0,
    # so sums over all lanes equal sums over the true lanes; variance via
    # E[x^2] - mean^2 (biased, matches torch.nn.LayerNorm), clamped at 0 to
    # avoid rsqrt(NaN) from f32 cancellation.
    inv_h = 1.0 / float(true_hid)
    mean = jnp.sum(g, axis=-1, keepdims=True) * inv_h
    var = jnp.sum(g * g, axis=-1, keepdims=True) * inv_h - mean * mean
    var = jnp.maximum(var, 0.0)
    ln = (g - mean) * jax.lax.rsqrt(var + 1e-5)
    ln = ln * gamma + beta                              # gamma/beta 0 on pad lanes
    e = prompt + ln                                     # prompt broadcasts over graphs

    # Project head: Linear(H,32) -> ReLU -> Linear(32,1) -> ReLU.
    # bf16 MXU operands, f32 accumulation; biases added in f32.
    z = jnp.dot(e.astype(jnp.bfloat16), pw1_ref[...],
                preferred_element_type=jnp.float32) + pb1
    z = jnp.maximum(z, 0.0)
    z = jnp.dot(z.astype(jnp.bfloat16), pw2_ref[...],
                preferred_element_type=jnp.float32) + pb2
    out_ref[...] = jnp.maximum(z, 0.0)                  # lane-dense (GP, HP) store


# ----------------------------------------------------------------------------
# Helpers
# ----------------------------------------------------------------------------
def _full_spec(shape):
    # Whole array as a single VMEM block (block_shape == array shape).
    return pl.BlockSpec(shape, lambda: tuple(0 for _ in shape))


def _round_up(n, m):
    return ((n + m - 1) // m) * m


def _pad2(a, rows, cols):
    out = jnp.zeros((rows, cols), a.dtype)
    return out.at[:a.shape[0], :a.shape[1]].set(a)


# ----------------------------------------------------------------------------
# One-time parameter packing (runs once, NOT on every forward call).
# ----------------------------------------------------------------------------
def pack_params(params, input_dim):
    hid_dim = params["ln_gamma"].shape[-1]
    layer_num = len(params["gin_layers"])
    head_hid = params["ph_w1"].shape[1]

    FP = _round_up(max(input_dim, hid_dim), _LANE)       # feature/hidden lanes
    HP = _round_up(max(head_hid, 1), _LANE)              # head hidden / out lanes
    W = max(FP, HP)                                      # lane chunk per vector

    # GIN weights, padded + bf16 once.
    w1s = jnp.stack([_pad2(w1, FP, FP) for (w1, _, _, _) in params["gin_layers"]]
                    ).astype(jnp.bfloat16)
    w2s = jnp.stack([_pad2(w2, FP, FP) for (_, _, w2, _) in params["gin_layers"]]
                    ).astype(jnp.bfloat16)

    # Single f32 vector slab: [b1_0, b2_0, ..., b1_{L-1}, b2_{L-1},
    #                          gamma, beta, prompt, pb1, pb2], one 128-aligned
    # lane chunk each, shape (1, (2L+5)*W).
    chunks = []
    for (_, b1, _, b2) in params["gin_layers"]:
        chunks.append(_pad2(b1, 1, W))
        chunks.append(_pad2(b2, 1, W))
    chunks.append(_pad2(params["ln_gamma"], 1, W))
    chunks.append(_pad2(params["ln_beta"], 1, W))
    chunks.append(_pad2(params["prompt"], 1, W))
    chunks.append(_pad2(params["ph_b1"], 1, W))
    chunks.append(_pad2(params["ph_b2"], 1, W))
    vec = jnp.concatenate(chunks, axis=1).astype(jnp.float32)

    # Head weights, padded + bf16 once.
    pw1 = _pad2(params["ph_w1"], FP, HP).astype(jnp.bfloat16)
    pw2 = _pad2(params["ph_w2"], HP, HP).astype(jnp.bfloat16)

    arrays = {"w1s": w1s, "w2s": w2s, "vec": vec, "pw1": pw1, "pw2": pw2}
    meta = {"layer_num": layer_num, "hid_dim": hid_dim,
            "fp": FP, "hp": HP, "chunk": W}
    return arrays, meta


# ----------------------------------------------------------------------------
# Jitted forward: only pads the per-batch data, then one fused pallas_call.
# ----------------------------------------------------------------------------
@functools.partial(jax.jit,
                   static_argnames=("layer_num", "hid_dim", "fp", "hp", "chunk"))
def _forward_impl(x, adj, pool, w1s, w2s, vec, pw1, pw2,
                  *, layer_num, hid_dim, fp, hp, chunk):
    num_nodes, _ = x.shape
    num_graphs = pool.shape[0]

    NP = _round_up(num_nodes, _LANE)                     # node dim (lane for adj)
    GP = _round_up(num_graphs, _SUBLANE)                 # graph rows (sublane)

    # Zero-pad the per-batch data (zero padding preserves the math on the
    # real lanes). adj entries are 0/1(+I): exact in bf16.
    adj_p = _pad2(adj, NP, NP).astype(jnp.bfloat16)
    x_p = _pad2(x, NP, fp)
    pool_p = _pad2(pool, GP, NP).astype(jnp.bfloat16)

    args = (adj_p, x_p, pool_p, w1s, w2s, vec, pw1, pw2)

    # Explicit scoped-VMEM budget (default is 16/32 MiB depending on chip).
    in_bytes = sum(int(a.size) * a.dtype.itemsize for a in args)
    out_bytes = GP * hp * 4
    vmem_limit = max(2 * (in_bytes + out_bytes) + (4 << 20), 32 << 20)

    out_p = pl.pallas_call(
        functools.partial(_fused_kernel, num_layers=layer_num,
                          true_hid=hid_dim, fp=fp, hp=hp, chunk=chunk),
        out_shape=jax.ShapeDtypeStruct((GP, hp), jnp.float32),
        in_specs=[_full_spec(a.shape) for a in args],
        out_specs=_full_spec((GP, hp)),
        compiler_params=pltpu.CompilerParams(vmem_limit_bytes=vmem_limit),
    )(*args)

    # Slice the real (num_graphs, 1) prediction out of the lane-dense slab
    # (padded graph rows / lanes carry garbage from the head biases).
    return out_p[:num_graphs, :1]


def importance_pipeline_forward(x, adj, pool, packed):
    """Full forward pass of ImportancePipeline as one fused Pallas kernel."""
    arrays, meta = packed
    return _forward_impl(x, adj, pool,
                         arrays["w1s"], arrays["w2s"], arrays["vec"],
                         arrays["pw1"], arrays["pw2"], **meta)


# ----------------------------------------------------------------------------
# Pure-JAX reference (f32, unpadded) for a correctness check.
# ----------------------------------------------------------------------------
def reference_forward(x, adj, pool, params):
    h = x
    for (w1, b1, w2, b2) in params["gin_layers"]:
        agg = adj @ h
        z = jnp.maximum(agg @ w1 + b1, 0.0)
        h = jnp.maximum(z @ w2 + b2, 0.0)
    g = pool @ h
    mean = jnp.mean(g, axis=-1, keepdims=True)
    var = jnp.mean((g - mean) ** 2, axis=-1, keepdims=True)
    ln = (g - mean) * jax.lax.rsqrt(var + 1e-5)
    ln = ln * params["ln_gamma"] + params["ln_beta"]
    e = params["prompt"] + ln
    z = jnp.maximum(e @ params["ph_w1"] + params["ph_b1"], 0.0)
    return jnp.maximum(z @ params["ph_w2"] + params["ph_b2"], 0.0)


# ----------------------------------------------------------------------------
# Deterministic parameter init (synthetic; mirrors the module's shapes)
# ----------------------------------------------------------------------------
def init_params(key, input_dim, hid_dim, layer_num):
    def linear_init(k, fan_in, fan_out):
        kw, kb = jax.random.split(k)
        bound = 1.0 / jnp.sqrt(fan_in)
        w = jax.random.uniform(kw, (fan_in, fan_out), jnp.float32, -bound, bound)
        b = jax.random.uniform(kb, (1, fan_out), jnp.float32, -bound, bound)
        return w, b

    keys = jax.random.split(key, 2 * layer_num + 3)
    gin_layers = []
    d_in = input_dim
    for l in range(layer_num):
        w1, b1 = linear_init(keys[2 * l], d_in, hid_dim)
        w2, b2 = linear_init(keys[2 * l + 1], hid_dim, hid_dim)
        gin_layers.append((w1, b1, w2, b2))
        d_in = hid_dim

    # prompt: kaiming_uniform_ on a (1, hid_dim) tensor.
    bound = jnp.sqrt(6.0 / hid_dim)
    prompt = jax.random.uniform(keys[2 * layer_num], (1, hid_dim),
                                jnp.float32, -bound, bound)

    ph_w1, ph_b1 = linear_init(keys[2 * layer_num + 1], hid_dim, 32)
    ph_w2, ph_b2 = linear_init(keys[2 * layer_num + 2], 32, 1)

    return {
        "gin_layers": gin_layers,
        "ln_gamma": jnp.ones((1, hid_dim), jnp.float32),
        "ln_beta": jnp.zeros((1, hid_dim), jnp.float32),
        "prompt": prompt,
        "ph_w1": ph_w1, "ph_b1": ph_b1,
        "ph_w2": ph_w2, "ph_b2": ph_b2,
    }


# ----------------------------------------------------------------------------
# main
# ----------------------------------------------------------------------------
if __name__ == "__main__":
    key = jax.random.PRNGKey(0)
    k_x, k_p = jax.random.split(key)

    # Small synthetic graph batch: 2 graphs x 8 nodes each, input_dim=16,
    # hid_dim=64, 3 GIN layers.
    num_graphs = 2
    nodes_per_graph = 8
    num_nodes = num_graphs * nodes_per_graph
    input_dim = 16
    hid_dim = 64
    layer_num = 3

    # Node features.
    x = jax.random.normal(k_x, (num_nodes, input_dim), jnp.float32)

    # Ring-graph edges inside each graph -> dense GIN aggregation matrix
    # A_hat = A + (1 + eps) * I with eps = 0 (glue, plain JAX).
    adj = jnp.zeros((num_nodes, num_nodes), jnp.float32)
    for g in range(num_graphs):
        for i in range(nodes_per_graph):
            src = g * nodes_per_graph + i
            dst = g * nodes_per_graph + (i + 1) % nodes_per_graph
            adj = adj.at[src, dst].set(1.0)
            adj = adj.at[dst, src].set(1.0)
    adj = adj + jnp.eye(num_nodes, dtype=jnp.float32)

    # Mean-pooling matrix [num_graphs, num_nodes].
    pool = jnp.zeros((num_graphs, num_nodes), jnp.float32)
    for g in range(num_graphs):
        s = g * nodes_per_graph
        pool = pool.at[g, s:s + nodes_per_graph].set(1.0 / nodes_per_graph)

    params = init_params(k_p, input_dim, hid_dim, layer_num)

    # One-time parameter packing (pad / stack / bf16-cast hoisted out of the
    # per-call path).
    packed = pack_params(params, input_dim)

    out = importance_pipeline_forward(x, adj, pool, packed)
    jax.block_until_ready(out)

    ref = reference_forward(x, adj, pool, params)

    assert out.shape == (num_graphs, 1)
    assert bool(jnp.all(out >= 0.0))                        # final ReLU
    assert bool(jnp.allclose(out, ref, rtol=2e-2, atol=2e-2)), (out, ref)
    print("KERNEL_OK")
</pallas_src>

<mosaic_0001>
module attributes {stable_mosaic.version = 11 : i64} {
  func.func @_fused_kernel(%arg0: memref<128x128xbf16, #tpu.memory_space<vmem>>, %arg1: memref<128x128xf32, #tpu.memory_space<vmem>>, %arg2: memref<8x128xbf16, #tpu.memory_space<vmem>>, %arg3: memref<3x128x128xbf16, #tpu.memory_space<vmem>>, %arg4: memref<3x128x128xbf16, #tpu.memory_space<vmem>>, %arg5: memref<1x1408xf32, #tpu.memory_space<vmem>>, %arg6: memref<128x128xbf16, #tpu.memory_space<vmem>>, %arg7: memref<128x128xbf16, #tpu.memory_space<vmem>>, %arg8: memref<8x128xf32, #tpu.memory_space<vmem>>) attributes {dimension_semantics = [], scalar_prefetch = 0 : i64, scratch_operands = 0 : i64, tpu.core_type = #tpu.core_type<tc>} {
    %c0 = arith.constant 0 : index
    %c0_0 = arith.constant 0 : index
    %0 = vector.load %arg1[%c0, %c0_0] : memref<128x128xf32, #tpu.memory_space<vmem>>, vector<128x128xf32>
    %c0_1 = arith.constant 0 : index
    %c0_2 = arith.constant 0 : index
    %1 = vector.load %arg0[%c0_1, %c0_2] : memref<128x128xbf16, #tpu.memory_space<vmem>>, vector<128x128xbf16>
    %2 = arith.truncf %0 : vector<128x128xf32> to vector<128x128xbf16>
    %cst = arith.constant dense<0.000000e+00> : vector<128x128xf32>
    %3 = tpu.matmul %1, %2, %cst {dimension_numbers = #tpu.dot_dimension_numbers<[1], [0], [0], [1], [0, 0, 1, 1], [], []>} : vector<128x128xbf16>, vector<128x128xbf16>, vector<128x128xf32> -> vector<128x128xf32>
    %4 = arith.truncf %3 : vector<128x128xf32> to vector<128x128xbf16>
    %c0_3 = arith.constant 0 : index
    %c0_4 = arith.constant 0 : index
    %c0_5 = arith.constant 0 : index
    %5 = vector.load %arg3[%c0_3, %c0_4, %c0_5] : memref<3x128x128xbf16, #tpu.memory_space<vmem>>, vector<1x128x128xbf16>
    %6 = vector.shape_cast %5 : vector<1x128x128xbf16> to vector<128x128xbf16>
    %cst_6 = arith.constant dense<0.000000e+00> : vector<128x128xf32>
    %7 = tpu.matmul %4, %6, %cst_6 {dimension_numbers = #tpu.dot_dimension_numbers<[1], [0], [0], [1], [0, 0, 1, 1], [], []>} : vector<128x128xbf16>, vector<128x128xbf16>, vector<128x128xf32> -> vector<128x128xf32>
    %c0_7 = arith.constant 0 : index
    %c0_8 = arith.constant 0 : index
    %8 = vector.load %arg5[%c0_7, %c0_8] : memref<1x1408xf32, #tpu.memory_space<vmem>>, vector<1x128xf32>
    %9 = vector.broadcast %8 : vector<1x128xf32> to vector<128x128xf32>
    %10 = arith.addf %7, %9 : vector<128x128xf32>
    %cst_9 = arith.constant 0.000000e+00 : f32
    %11 = vector.broadcast %cst_9 : f32 to vector<128x128xf32>
    %12 = arith.maximumf %10, %11 : vector<128x128xf32>
    %13 = arith.truncf %12 : vector<128x128xf32> to vector<128x128xbf16>
    %c0_10 = arith.constant 0 : index
    %c0_11 = arith.constant 0 : index
    %c0_12 = arith.constant 0 : index
    %14 = vector.load %arg4[%c0_10, %c0_11, %c0_12] : memref<3x128x128xbf16, #tpu.memory_space<vmem>>, vector<1x128x128xbf16>
    %15 = vector.shape_cast %14 : vector<1x128x128xbf16> to vector<128x128xbf16>
    %cst_13 = arith.constant dense<0.000000e+00> : vector<128x128xf32>
    %16 = tpu.matmul %13, %15, %cst_13 {dimension_numbers = #tpu.dot_dimension_numbers<[1], [0], [0], [1], [0, 0, 1, 1], [], []>} : vector<128x128xbf16>, vector<128x128xbf16>, vector<128x128xf32> -> vector<128x128xf32>
    %c0_14 = arith.constant 0 : index
    %c128 = arith.constant 128 : index
    %17 = vector.load %arg5[%c0_14, %c128] : memref<1x1408xf32, #tpu.memory_space<vmem>>, vector<1x128xf32>
    %18 = vector.broadcast %17 : vector<1x128xf32> to vector<128x128xf32>
    %19 = arith.addf %16, %18 : vector<128x128xf32>
    %cst_15 = arith.constant 0.000000e+00 : f32
    %20 = vector.broadcast %cst_15 : f32 to vector<128x128xf32>
    %21 = arith.maximumf %19, %20 : vector<128x128xf32>
    %c0_16 = arith.constant 0 : index
    %c0_17 = arith.constant 0 : index
    %22 = vector.load %arg0[%c0_16, %c0_17] : memref<128x128xbf16, #tpu.memory_space<vmem>>, vector<128x128xbf16>
    %23 = arith.truncf %21 : vector<128x128xf32> to vector<128x128xbf16>
    %cst_18 = arith.constant dense<0.000000e+00> : vector<128x128xf32>
    %24 = tpu.matmul %22, %23, %cst_18 {dimension_numbers = #tpu.dot_dimension_numbers<[1], [0], [0], [1], [0, 0, 1, 1], [], []>} : vector<128x128xbf16>, vector<128x128xbf16>, vector<128x128xf32> -> vector<128x128xf32>
    %25 = arith.truncf %24 : vector<128x128xf32> to vector<128x128xbf16>
    %c1 = arith.constant 1 : index
    %c0_19 = arith.constant 0 : index
    %c0_20 = arith.constant 0 : index
    %26 = vector.load %arg3[%c1, %c0_19, %c0_20] : memref<3x128x128xbf16, #tpu.memory_space<vmem>>, vector<1x128x128xbf16>
    %27 = vector.shape_cast %26 : vector<1x128x128xbf16> to vector<128x128xbf16>
    %cst_21 = arith.constant dense<0.000000e+00> : vector<128x128xf32>
    %28 = tpu.matmul %25, %27, %cst_21 {dimension_numbers = #tpu.dot_dimension_numbers<[1], [0], [0], [1], [0, 0, 1, 1], [], []>} : vector<128x128xbf16>, vector<128x128xbf16>, vector<128x128xf32> -> vector<128x128xf32>
    %c0_22 = arith.constant 0 : index
    %c256 = arith.constant 256 : index
    %29 = vector.load %arg5[%c0_22, %c256] : memref<1x1408xf32, #tpu.memory_space<vmem>>, vector<1x128xf32>
    %30 = vector.broadcast %29 : vector<1x128xf32> to vector<128x128xf32>
    %31 = arith.addf %28, %30 : vector<128x128xf32>
    %cst_23 = arith.constant 0.000000e+00 : f32
    %32 = vector.broadcast %cst_23 : f32 to vector<128x128xf32>
    %33 = arith.maximumf %31, %32 : vector<128x128xf32>
    %34 = arith.truncf %33 : vector<128x128xf32> to vector<128x128xbf16>
    %c1_24 = arith.constant 1 : index
    %c0_25 = arith.constant 0 : index
    %c0_26 = arith.constant 0 : index
    %35 = vector.load %arg4[%c1_24, %c0_25, %c0_26] : memref<3x128x128xbf16, #tpu.memory_space<vmem>>, vector<1x128x128xbf16>
    %36 = vector.shape_cast %35 : vector<1x128x128xbf16> to vector<128x128xbf16>
    %cst_27 = arith.constant dense<0.000000e+00> : vector<128x128xf32>
    %37 = tpu.matmul %34, %36, %cst_27 {dimension_numbers = #tpu.dot_dimension_numbers<[1], [0], [0], [1], [0, 0, 1, 1], [], []>} : vector<128x128xbf16>, vector<128x128xbf16>, vector<128x128xf32> -> vector<128x128xf32>
    %c0_28 = arith.constant 0 : index
    %c384 = arith.constant 384 : index
    %38 = vector.load %arg5[%c0_28, %c384] : memref<1x1408xf32, #tpu.memory_space<vmem>>, vector<1x128xf32>
    %39 = vector.broadcast %38 : vector<1x128xf32> to vector<128x128xf32>
    %40 = arith.addf %37, %39 : vector<128x128xf32>
    %cst_29 = arith.constant 0.000000e+00 : f32
    %41 = vector.broadcast %cst_29 : f32 to vector<128x128xf32>
    %42 = arith.maximumf %40, %41 : vector<128x128xf32>
    %c0_30 = arith.constant 0 : index
    %c0_31 = arith.constant 0 : index
    %43 = vector.load %arg0[%c0_30, %c0_31] : memref<128x128xbf16, #tpu.memory_space<vmem>>, vector<128x128xbf16>
    %44 = arith.truncf %42 : vector<128x128xf32> to vector<128x128xbf16>
    %cst_32 = arith.constant dense<0.000000e+00> : vector<128x128xf32>
    %45 = tpu.matmul %43, %44, %cst_32 {dimension_numbers = #tpu.dot_dimension_numbers<[1], [0], [0], [1], [0, 0, 1, 1], [], []>} : vector<128x128xbf16>, vector<128x128xbf16>, vector<128x128xf32> -> vector<128x128xf32>
    %46 = arith.truncf %45 : vector<128x128xf32> to vector<128x128xbf16>
    %c2 = arith.constant 2 : index
    %c0_33 = arith.constant 0 : index
    %c0_34 = arith.constant 0 : index
    %47 = vector.load %arg3[%c2, %c0_33, %c0_34] : memref<3x128x128xbf16, #tpu.memory_space<vmem>>, vector<1x128x128xbf16>
    %48 = vector.shape_cast %47 : vector<1x128x128xbf16> to vector<128x128xbf16>
    %cst_35 = arith.constant dense<0.000000e+00> : vector<128x128xf32>
    %49 = tpu.matmul %46, %48, %cst_35 {dimension_numbers = #tpu.dot_dimension_numbers<[1], [0], [0], [1], [0, 0, 1, 1], [], []>} : vector<128x128xbf16>, vector<128x128xbf16>, vector<128x128xf32> -> vector<128x128xf32>
    %c0_36 = arith.constant 0 : index
    %c512 = arith.constant 512 : index
    %50 = vector.load %arg5[%c0_36, %c512] : memref<1x1408xf32, #tpu.memory_space<vmem>>, vector<1x128xf32>
    %51 = vector.broadcast %50 : vector<1x128xf32> to vector<128x128xf32>
    %52 = arith.addf %49, %51 : vector<128x128xf32>
    %cst_37 = arith.constant 0.000000e+00 : f32
    %53 = vector.broadcast %cst_37 : f32 to vector<128x128xf32>
    %54 = arith.maximumf %52, %53 : vector<128x128xf32>
    %55 = arith.truncf %54 : vector<128x128xf32> to vector<128x128xbf16>
    %c2_38 = arith.constant 2 : index
    %c0_39 = arith.constant 0 : index
    %c0_40 = arith.constant 0 : index
    %56 = vector.load %arg4[%c2_38, %c0_39, %c0_40] : memref<3x128x128xbf16, #tpu.memory_space<vmem>>, vector<1x128x128xbf16>
    %57 = vector.shape_cast %56 : vector<1x128x128xbf16> to vector<128x128xbf16>
    %cst_41 = arith.constant dense<0.000000e+00> : vector<128x128xf32>
    %58 = tpu.matmul %55, %57, %cst_41 {dimension_numbers = #tpu.dot_dimension_numbers<[1], [0], [0], [1], [0, 0, 1, 1], [], []>} : vector<128x128xbf16>, vector<128x128xbf16>, vector<128x128xf32> -> vector<128x128xf32>
    %c0_42 = arith.constant 0 : index
    %c640 = arith.constant 640 : index
    %59 = vector.load %arg5[%c0_42, %c640] : memref<1x1408xf32, #tpu.memory_space<vmem>>, vector<1x128xf32>
    %60 = vector.broadcast %59 : vector<1x128xf32> to vector<128x128xf32>
    %61 = arith.addf %58, %60 : vector<128x128xf32>
    %cst_43 = arith.constant 0.000000e+00 : f32
    %62 = vector.broadcast %cst_43 : f32 to vector<128x128xf32>
    %63 = arith.maximumf %61, %62 : vector<128x128xf32>
    %c0_44 = arith.constant 0 : index
    %c0_45 = arith.constant 0 : index
    %64 = vector.load %arg2[%c0_44, %c0_45] : memref<8x128xbf16, #tpu.memory_space<vmem>>, vector<8x128xbf16>
    %65 = arith.truncf %63 : vector<128x128xf32> to vector<128x128xbf16>
    %cst_46 = arith.constant dense<0.000000e+00> : vector<8x128xf32>
    %66 = tpu.matmul %64, %65, %cst_46 {dimension_numbers = #tpu.dot_dimension_numbers<[1], [0], [0], [1], [0, 0, 1, 1], [], []>} : vector<8x128xbf16>, vector<128x128xbf16>, vector<8x128xf32> -> vector<8x128xf32>
    %c0_47 = arith.constant 0 : index
    %c768 = arith.constant 768 : index
    %67 = vector.load %arg5[%c0_47, %c768] : memref<1x1408xf32, #tpu.memory_space<vmem>>, vector<1x128xf32>
    %c0_48 = arith.constant 0 : index
    %c896 = arith.constant 896 : index
    %68 = vector.load %arg5[%c0_48, %c896] : memref<1x1408xf32, #tpu.memory_space<vmem>>, vector<1x128xf32>
    %c0_49 = arith.constant 0 : index
    %c1024 = arith.constant 1024 : index
    %69 = vector.load %arg5[%c0_49, %c1024] : memref<1x1408xf32, #tpu.memory_space<vmem>>, vector<1x128xf32>
    %c0_50 = arith.constant 0 : index
    %c1152 = arith.constant 1152 : index
    %70 = vector.load %arg5[%c0_50, %c1152] : memref<1x1408xf32, #tpu.memory_space<vmem>>, vector<1x128xf32>
    %c0_51 = arith.constant 0 : index
    %c1280 = arith.constant 1280 : index
    %71 = vector.load %arg5[%c0_51, %c1280] : memref<1x1408xf32, #tpu.memory_space<vmem>>, vector<1x128xf32>
    %cst_52 = arith.constant dense<0.000000e+00> : vector<8xf32>
    %72 = vector.multi_reduction <add>, %66, %cst_52 [1] : vector<8x128xf32> to vector<8xf32>
    %73 = vector.shape_cast %72 : vector<8xf32> to vector<8x1xf32>
    %cst_53 = arith.constant 1.562500e-02 : f32
    %74 = vector.broadcast %cst_53 : f32 to vector<8x1xf32>
    %75 = arith.mulf %73, %74 : vector<8x1xf32>
    %76 = arith.mulf %66, %66 : vector<8x128xf32>
    %cst_54 = arith.constant dense<0.000000e+00> : vector<8xf32>
    %77 = vector.multi_reduction <add>, %76, %cst_54 [1] : vector<8x128xf32> to vector<8xf32>
    %78 = vector.shape_cast %77 : vector<8xf32> to vector<8x1xf32>
    %cst_55 = arith.constant 1.562500e-02 : f32
    %79 = vector.broadcast %cst_55 : f32 to vector<8x1xf32>
    %80 = arith.mulf %78, %79 : vector<8x1xf32>
    %81 = arith.mulf %75, %75 : vector<8x1xf32>
    %82 = arith.subf %80, %81 : vector<8x1xf32>
    %cst_56 = arith.constant 0.000000e+00 : f32
    %83 = vector.broadcast %cst_56 : f32 to vector<8x1xf32>
    %84 = arith.maximumf %82, %83 : vector<8x1xf32>
    %85 = vector.broadcast %75 : vector<8x1xf32> to vector<8x128xf32>
    %86 = arith.subf %66, %85 : vector<8x128xf32>
    %cst_57 = arith.constant 9.99999974E-6 : f32
    %87 = vector.broadcast %cst_57 : f32 to vector<8x1xf32>
    %88 = arith.addf %84, %87 : vector<8x1xf32>
    %89 = math.rsqrt %88 : vector<8x1xf32>
    %90 = vector.broadcast %89 : vector<8x1xf32> to vector<8x128xf32>
    %91 = arith.mulf %86, %90 : vector<8x128xf32>
    %92 = vector.broadcast %67 : vector<1x128xf32> to vector<8x128xf32>
    %93 = arith.mulf %91, %92 : vector<8x128xf32>
    %94 = vector.broadcast %68 : vector<1x128xf32> to vector<8x128xf32>
    %95 = arith.addf %93, %94 : vector<8x128xf32>
    %96 = vector.broadcast %69 : vector<1x128xf32> to vector<8x128xf32>
    %97 = arith.addf %96, %95 : vector<8x128xf32>
    %98 = arith.truncf %97 : vector<8x128xf32> to vector<8x128xbf16>
    %c0_58 = arith.constant 0 : index
    %c0_59 = arith.constant 0 : index
    %99 = vector.load %arg6[%c0_58, %c0_59] : memref<128x128xbf16, #tpu.memory_space<vmem>>, vector<128x128xbf16>
    %cst_60 = arith.constant dense<0.000000e+00> : vector<8x128xf32>
    %100 = tpu.matmul %98, %99, %cst_60 {dimension_numbers = #tpu.dot_dimension_numbers<[1], [0], [0], [1], [0, 0, 1, 1], [], []>} : vector<8x128xbf16>, vector<128x128xbf16>, vector<8x128xf32> -> vector<8x128xf32>
    %101 = vector.broadcast %70 : vector<1x128xf32> to vector<8x128xf32>
    %102 = arith.addf %100, %101 : vector<8x128xf32>
    %cst_61 = arith.constant 0.000000e+00 : f32
    %103 = vector.broadcast %cst_61 : f32 to vector<8x128xf32>
    %104 = arith.maximumf %102, %103 : vector<8x128xf32>
    %105 = arith.truncf %104 : vector<8x128xf32> to vector<8x128xbf16>
    %c0_62 = arith.constant 0 : index
    %c0_63 = arith.constant 0 : index
    %106 = vector.load %arg7[%c0_62, %c0_63] : memref<128x128xbf16, #tpu.memory_space<vmem>>, vector<128x128xbf16>
    %cst_64 = arith.constant dense<0.000000e+00> : vector<8x128xf32>
    %107 = tpu.matmul %105, %106, %cst_64 {dimension_numbers = #tpu.dot_dimension_numbers<[1], [0], [0], [1], [0, 0, 1, 1], [], []>} : vector<8x128xbf16>, vector<128x128xbf16>, vector<8x128xf32> -> vector<8x128xf32>
    %108 = vector.broadcast %71 : vector<1x128xf32> to vector<8x128xf32>
    %109 = arith.addf %107, %108 : vector<8x128xf32>
    %cst_65 = arith.constant 0.000000e+00 : f32
    %110 = vector.broadcast %cst_65 : f32 to vector<8x128xf32>
    %111 = arith.maximumf %109, %110 : vector<8x128xf32>
    %c0_66 = arith.constant 0 : index
    %c0_67 = arith.constant 0 : index
    %112 = vector.load %arg8[%c0_66, %c0_67] : memref<8x128xf32, #tpu.memory_space<vmem>>, vector<8x128xf32>
    tpu.vector_store %arg8[%c0_66, %c0_67], %111 {strides = array<i32>} : memref<8x128xf32, #tpu.memory_space<vmem>>, vector<8x128xf32>,
    return
  }
}

</mosaic_0001>

<llo_original>
// kernel: _forward_impl.1
$region0: #{_forward_impl.1}
  #allocation0 [shape = 'u32[]', space=smem, size = 0x4, offset = 0x4, fixed_abs, tag = 'smem constant byte address 0x4 - core index']
  #allocation1 [shape = 'u32[144,128]{1,0:T(1,128)}', space=vmem, size = 0x12000, scoped, tag = 'internal scratch']
  %s0 = inlined_call_operand.vmem [shape: bf16[128,128], index: 0, kind: input, shape index: {}]
  %s1 = inlined_call_operand.vmem [shape: f32[128,128], index: 1, kind: input, shape index: {}]
  %s2 = inlined_call_operand.vmem [shape: bf16[8,128], index: 2, kind: input, shape index: {}]
  %s3 = inlined_call_operand.vmem [shape: bf16[3,128,128], index: 3, kind: input, shape index: {}]
  %s4 = inlined_call_operand.hbm [shape: bf16[3,128,128], index: 4, kind: input, shape index: {}]
  %s5 = inlined_call_operand.hbm [shape: f32[1,1408], index: 5, kind: input, shape index: {}]
  %s6 = inlined_call_operand.vmem [shape: bf16[128,128], index: 6, kind: input, shape index: {}]
  %s7 = inlined_call_operand.hbm [shape: bf16[128,128], index: 7, kind: input, shape index: {}]
  %s8 = inlined_call_operand.vmem [shape: f32[8,128], index: 8, kind: output, shape index: {}]
  %s9 = sld [smem:[#allocation0]]
  $region54: #{_forward_impl.1} parent=0
    _
  %s11 = ssub.s32 1, %s9
  %s12 = scalar_select 0, %s11, %s9
  $region1: #{_forward_impl.1} parent=0
    #allocation2 [shape = 'u8[98304]{0}', space=vmem, size = 0x18000, scoped, tag = 'input window, operand 4, single buffered']
    #allocation3 [shape = 's32[1]{0}', space=sflag, size = 0x4, scoped, tag = 'scoped memory for _forward_impl.1']
    #allocation4 [shape = 'u8[5632]{0}', space=vmem, size = 0x1800, scoped, tag = 'input window, operand 5, single buffered']
    #allocation5 [shape = 's32[1]{0}', space=sflag, size = 0x4, scoped, tag = 'scoped memory for _forward_impl.1']
    #allocation6 [shape = 'u8[32768]{0}', space=vmem, size = 0x8000, scoped, tag = 'input window, operand 7, single buffered']
    %13 = vsyncpa [#allocation3], 0
    %14 = vsyncpa [#allocation5], 0
    // Predicated region
    $region2: #{_forward_impl.1} parent=1 // pred_check
      _
    $region3: #{_forward_impl.1} parent=1 // pred_check_branch
      %16 = sbr.rel (0) target = $region5
    $region4: #{_forward_impl.1} parent=1 // pred_region
      _
    $region5: #{_forward_impl.1} parent=1 // pred_fallthru
      _
    // Predicated region
    $region6: #{_forward_impl.1} parent=1 // pred_check
      _
    $region7: #{_forward_impl.1} parent=1 // pred_check_branch
      %18 = sbr.rel (0) target = $region9
    $region8: #{_forward_impl.1} parent=1 // pred_region
      _
    $region9: #{_forward_impl.1} parent=1 // pred_fallthru
      _
    // Predicated region
    $region10: #{_forward_impl.1} parent=1 // pred_check
      _
    $region11: #{_forward_impl.1} parent=1 // pred_check_branch
      %20 = sbr.rel (0) target = $region13
    $region12: #{_forward_impl.1} parent=1 // pred_region
      _
    $region13: #{_forward_impl.1} parent=1 // pred_fallthru
      _
    // Predicated region
    $region14: #{_forward_impl.1} parent=1 // pred_check
      _
    $region15: #{_forward_impl.1} parent=1 // pred_check_branch
      %22 = sbr.rel (0) target = $region17
    $region16: #{_forward_impl.1} parent=1 // pred_region
      _
    $region17: #{_forward_impl.1} parent=1 // pred_fallthru
      _
    // Predicated region
    $region18: #{_forward_impl.1} parent=1 // pred_check
      _
    $region19: #{_forward_impl.1} parent=1 // pred_check_branch
      %24 = sbr.rel (0) target = $region21
    $region20: #{_forward_impl.1} parent=1 // pred_region
      %s26 = ssub.s32 3072, 3072
      %27 = vsyncadd [#allocation3], %s26
      %s28 = sshll.u32 [#allocation2], 4
      %s29 = int_to_ptr.vmem [resolvable:$true] %s28
      %34 = dma.hbm_to_vmem [thread:$0]  %s4, 3072, %s29, [#allocation3], 64, 64, 4
    $region21: #{_forward_impl.1} parent=1 // pred_fallthru
      _
    // Predicated region
    $region22: #{_forward_impl.1} parent=1 // pred_check
      _
    $region23: #{_forward_impl.1} parent=1 // pred_check_branch
      %36 = sbr.rel (0) target = $region25
    $region24: #{_forward_impl.1} parent=1 // pred_region
      %s38 = ssub.s32 176, 176
      %39 = vsyncadd [#allocation5], %s38
      %s41 = sshll.u32 [#allocation4], 4
      %s42 = int_to_ptr.vmem [resolvable:$true] %s41
      %44 = dma.hbm_to_vmem [thread:$0]  %s5, 176, %s42, [#allocation5]
    $region25: #{_forward_impl.1} parent=1 // pred_fallthru
      _
    // Predicated region
    $region26: #{_forward_impl.1} parent=1 // pred_check
      _
    $region27: #{_forward_impl.1} parent=1 // pred_check_branch
      %46 = sbr.rel (0) target = $region29
    $region28: #{_forward_impl.1} parent=1 // pred_region
      _
    $region29: #{_forward_impl.1} parent=1 // pred_fallthru
      _
    // Predicated region
    $region30: #{_forward_impl.1} parent=1 // pred_check
      _
    $region31: #{_forward_impl.1} parent=1 // pred_check_branch
      %48 = sbr.rel (0) target = $region33
    $region32: #{_forward_impl.1} parent=1 // pred_region
      %s50 = ssub.s32 1024, 1024
      %51 = vsyncadd [#allocation5], %s50
      %s52 = sshll.u32 [#allocation6], 4
      %s53 = int_to_ptr.vmem [resolvable:$true] %s52
      %58 = dma.hbm_to_vmem [thread:$0]  %s7, 1024, %s53, [#allocation5], 64, 64, 4
    $region33: #{_forward_impl.1} parent=1 // pred_fallthru
      _
    // Predicated region
    $region34: #{_forward_impl.1} parent=1 // pred_check
      _
    $region35: #{_forward_impl.1} parent=1 // pred_check_branch
      %60 = sbr.rel (0) target = $region37
    $region36: #{_forward_impl.1} parent=1 // pred_region
      %61 = dma.done [#allocation3], 3072
    $region37: #{_forward_impl.1} parent=1 // pred_fallthru
      _
    // Predicated region
    $region38: #{_forward_impl.1} parent=1 // pred_check
      _
    $region39: #{_forward_impl.1} parent=1 // pred_check_branch
      %63 = sbr.rel (0) target = $region41
    $region40: #{_forward_impl.1} parent=1 // pred_region
      %64 = dma.done [#allocation5], 176
    $region41: #{_forward_impl.1} parent=1 // pred_fallthru
      _
    // Predicated region
    $region42: #{_forward_impl.1} parent=1 // pred_check
      _
    $region43: #{_forward_impl.1} parent=1 // pred_check_branch
      %66 = sbr.rel (0) target = $region45
    $region44: #{_forward_impl.1} parent=1 // pred_region
      %67 = dma.done [#allocation5], 1024
    $region45: #{_forward_impl.1} parent=1 // pred_fallthru
      _
    %v69 = vld [vmem:[%s1] sm:$0xff]
    %v70 = vld [vmem:[%s1 + $0x8] sm:$0xff]
    %v71 = vld [vmem:[%s1 + $0x10] sm:$0xff]
    %v72 = vld [vmem:[%s1 + $0x18] sm:$0xff]
    %v73 = vld [vmem:[%s1 + $0x20] sm:$0xff]
    %v74 = vld [vmem:[%s1 + $0x28] sm:$0xff]
    %v75 = vld [vmem:[%s1 + $0x30] sm:$0xff]
    %v76 = vld [vmem:[%s1 + $0x38] sm:$0xff]
    %v77 = vld [vmem:[%s1 + $0x40] sm:$0xff]
    %v78 = vld [vmem:[%s1 + $0x48] sm:$0xff]
    %v79 = vld [vmem:[%s1 + $0x50] sm:$0xff]
    %v80 = vld [vmem:[%s1 + $0x58] sm:$0xff]
    %v81 = vld [vmem:[%s1 + $0x60] sm:$0xff]
    %v82 = vld [vmem:[%s1 + $0x68] sm:$0xff]
    %v83 = vld [vmem:[%s1 + $0x70] sm:$0xff]
    %v84 = vld [vmem:[%s1 + $0x78] sm:$0xff]
    %v85 = vld [vmem:[%s0] sm:$0xf]
    %v86 = vld [vmem:[%s0 + $0x4] sm:$0xf]
    %v87 = vld [vmem:[%s0 + $0x8] sm:$0xf]
    %v88 = vld [vmem:[%s0 + $0xc] sm:$0xf]
    %v89 = vld [vmem:[%s0 + $0x10] sm:$0xf]
    %v90 = vld [vmem:[%s0 + $0x14] sm:$0xf]
    %v91 = vld [vmem:[%s0 + $0x18] sm:$0xf]
    %v92 = vld [vmem:[%s0 + $0x1c] sm:$0xf]
    %v93 = vld [vmem:[%s0 + $0x20] sm:$0xf]
    %v94 = vld [vmem:[%s0 + $0x24] sm:$0xf]
    %v95 = vld [vmem:[%s0 + $0x28] sm:$0xf]
    %v96 = vld [vmem:[%s0 + $0x2c] sm:$0xf]
    %v97 = vld [vmem:[%s0 + $0x30] sm:$0xf]
    %v98 = vld [vmem:[%s0 + $0x34] sm:$0xf]
    %v99 = vld [vmem:[%s0 + $0x38] sm:$0xf]
    %v100 = vld [vmem:[%s0 + $0x3c] sm:$0xf]
    %v101 = vpack.c.bf16 %v70, %v69
    %v102 = vpack.c.bf16 %v72, %v71
    %v103 = vpack.c.bf16 %v74, %v73
    %v104 = vpack.c.bf16 %v76, %v75
    %v105 = vpack.c.bf16 %v78, %v77
    %v106 = vpack.c.bf16 %v80, %v79
    %v107 = vpack.c.bf16 %v82, %v81
    %v108 = vpack.c.bf16 %v84, %v83
    %v125 = vunpack.c.l.b16 %v85
    %v126 = vunpack.c.l.b16 %v86
    %v127 = vunpack.c.l.b16 %v87
    %v128 = vunpack.c.l.b16 %v88
    %v129 = vunpack.c.l.b16 %v89
    %v130 = vunpack.c.l.b16 %v90
    %v131 = vunpack.c.l.b16 %v91
    %v132 = vunpack.c.l.b16 %v92
    %v133 = vunpack.c.l.b16 %v93
    %v134 = vunpack.c.l.b16 %v94
    %v135 = vunpack.c.l.b16 %v95
    %v136 = vunpack.c.l.b16 %v96
    %v137 = vunpack.c.l.b16 %v97
    %v138 = vunpack.c.l.b16 %v98
    %v139 = vunpack.c.l.b16 %v99
    %v140 = vunpack.c.l.b16 %v100
    %v141 = vpack.c.b16 %v126, %v125
    %v142 = vpack.c.b16 %v128, %v127
    %v143 = vpack.c.b16 %v130, %v129
    %v144 = vpack.c.b16 %v132, %v131
    %v145 = vpack.c.b16 %v134, %v133
    %v146 = vpack.c.b16 %v136, %v135
    %v147 = vpack.c.b16 %v138, %v137
    %v148 = vpack.c.b16 %v140, %v139
    %157 = vmatprep.subr.bf16.mxu0 0
    %158 = vmatpush1.bf16.msra.mxu0 %v108
    %159 = vmatprep.subr.bf16.mxu0 0
    %160 = vmatpush1.bf16.msra.mxu0 %v107
    %161 = vmatprep.subr.bf16.mxu0 0
    %162 = vmatpush1.bf16.msra.mxu0 %v106
    %163 = vmatprep.subr.bf16.mxu0 0
    %164 = vmatpush1.bf16.msra.mxu0 %v105
    %165 = vmatprep.subr.bf16.mxu0 0
    %166 = vmatpush1.bf16.msra.mxu0 %v104
    %167 = vmatprep.subr.bf16.mxu0 0
    %168 = vmatpush1.bf16.msra.mxu0 %v103
    %169 = vmatprep.subr.bf16.mxu0 0
    %170 = vmatpush1.bf16.msra.mxu0 %v102
    %171 = vmatprep.subr.bf16.mxu0 0
    %172 = vmatpush1.bf16.msra.mxu0 %v101
    %173 = vmatprep.subr.bf16.mxu0 0
    %174 = vmatpush2.bf16.msra.mxu0 0
    %175 = vmatprep.subr.bf16.mxu0 0
    %176 = vmatpush2.bf16.msra.mxu0 0
    %177 = vmatprep.subr.bf16.mxu0 0
    %178 = vmatpush2.bf16.msra.mxu0 0
    %179 = vmatprep.subr.bf16.mxu0 0
    %180 = vmatpush2.bf16.msra.mxu0 0
    %181 = vmatprep.subr.bf16.mxu0 0
    %182 = vmatpush2.bf16.msra.mxu0 0
    %183 = vmatprep.subr.bf16.mxu0 0
    %184 = vmatpush2.bf16.msra.mxu0 0
    %185 = vmatprep.subr.bf16.mxu0 0
    %186 = vmatpush2.bf16.msra.mxu0 0
    %187 = vmatprep.subr.bf16.mxu0 0
    %188 = vmatpush2.bf16.msra.mxu0 0
    %189 = vmatprep.mubr.bf16.mxu0 0
    %190 = vmatmul.mubr.bf16.gmra.mxu0 %v141
    %v191 = vpop.f32.mrf.mxu0
    %v192 = vadd.f32 0.0, %v191
    %v193 = vpop.f32.mrf.mxu0
    %v194 = vpop.f32.mrf.mxu0
    %v195 = vadd.f32 0.0, %v194
    %v196 = vpop.f32.mrf.mxu0
    %197 = vmatprep.mubr.bf16.mxu0 0
    %198 = vmatmul.mubr.bf16.gmra.mxu0 %v142
    %v199 = vpop.f32.mrf.mxu0
    %v200 = vadd.f32 0.0, %v199
    %v201 = vpop.f32.mrf.mxu0
    %v202 = vpop.f32.mrf.mxu0
    %v203 = vadd.f32 0.0, %v202
    %v204 = vpop.f32.mrf.mxu0
    %205 = vmatprep.mubr.bf16.mxu0 0
    %206 = vmatmul.mubr.bf16.gmra.mxu0 %v143
    %v207 = vpop.f32.mrf.mxu0
    %v208 = vadd.f32 0.0, %v207
    %v209 = vpop.f32.mrf.mxu0
    %v210 = vpop.f32.mrf.mxu0
    %v211 = vadd.f32 0.0, %v210
    %v212 = vpop.f32.mrf.mxu0
    %213 = vmatprep.mubr.bf16.mxu0 0
    %214 = vmatmul.mubr.bf16.gmra.mxu0 %v144
    %v215 = vpop.f32.mrf.mxu0
    %v216 = vadd.f32 0.0, %v215
    %v217 = vpop.f32.mrf.mxu0
    %v218 = vpop.f32.mrf.mxu0
    %v219 = vadd.f32 0.0, %v218
    %v220 = vpop.f32.mrf.mxu0
    %221 = vmatprep.mubr.bf16.mxu0 0
    %222 = vmatmul.mubr.bf16.gmra.mxu0 %v145
    %v223 = vpop.f32.mrf.mxu0
    %v224 = vadd.f32 0.0, %v223
    %v225 = vpop.f32.mrf.mxu0
    %v226 = vpop.f32.mrf.mxu0
    %v227 = vadd.f32 0.0, %v226
    %v228 = vpop.f32.mrf.mxu0
    %229 = vmatprep.mubr.bf16.mxu0 0
    %230 = vmatmul.mubr.bf16.gmra.mxu0 %v146
    %v231 = vpop.f32.mrf.mxu0
    %v232 = vadd.f32 0.0, %v231
    %v233 = vpop.f32.mrf.mxu0
    %v234 = vpop.f32.mrf.mxu0
    %v235 = vadd.f32 0.0, %v234
    %v236 = vpop.f32.mrf.mxu0
    %237 = vmatprep.mubr.bf16.mxu0 0
    %238 = vmatmul.mubr.bf16.gmra.mxu0 %v147
    %v239 = vpop.f32.mrf.mxu0
    %v240 = vadd.f32 0.0, %v239
    %v241 = vpop.f32.mrf.mxu0
    %v242 = vpop.f32.mrf.mxu0
    %v243 = vadd.f32 0.0, %v242
    %v244 = vpop.f32.mrf.mxu0
    %245 = vmatprep.mubr.bf16.mxu0 0
    %246 = vmatmul.mubr.bf16.gmra.mxu0 %v148
    %v247 = vpop.f32.mrf.mxu0
    %v248 = vadd.f32 0.0, %v247
    %v249 = vpop.f32.mrf.mxu0
    %v250 = vpop.f32.mrf.mxu0
    %v251 = vadd.f32 0.0, %v250
    %v252 = vpop.f32.mrf.mxu0
    %253 = vdwg.mxu0
    %v254 = vpack.c.bf16 %v195, %v192
    %v255 = vpack.c.bf16 %v203, %v200
    %v256 = vpack.c.bf16 %v211, %v208
    %v257 = vpack.c.bf16 %v219, %v216
    %v258 = vpack.c.bf16 %v227, %v224
    %v259 = vpack.c.bf16 %v235, %v232
    %v260 = vpack.c.bf16 %v243, %v240
    %v261 = vpack.c.bf16 %v251, %v248
    %v262 = vld [vmem:[%s3] sm:$0xf]
    %v263 = vld [vmem:[%s3 + $0x4] sm:$0xf]
    %v264 = vld [vmem:[%s3 + $0x8] sm:$0xf]
    %v265 = vld [vmem:[%s3 + $0xc] sm:$0xf]
    %v266 = vld [vmem:[%s3 + $0x10] sm:$0xf]
    %v267 = vld [vmem:[%s3 + $0x14] sm:$0xf]
    %v268 = vld [vmem:[%s3 + $0x18] sm:$0xf]
    %v269 = vld [vmem:[%s3 + $0x1c] sm:$0xf]
    %v270 = vld [vmem:[%s3 + $0x20] sm:$0xf]
    %v271 = vld [vmem:[%s3 + $0x24] sm:$0xf]
    %v272 = vld [vmem:[%s3 + $0x28] sm:$0xf]
    %v273 = vld [vmem:[%s3 + $0x2c] sm:$0xf]
    %v274 = vld [vmem:[%s3 + $0x30] sm:$0xf]
    %v275 = vld [vmem:[%s3 + $0x34] sm:$0xf]
    %v276 = vld [vmem:[%s3 + $0x38] sm:$0xf]
    %v277 = vld [vmem:[%s3 + $0x3c] sm:$0xf]
    %v278 = vld [vmem:[#allocation4] sm:$0x1]
    %v280 = vlaneseq
    %v281 = vshrl.u32 %v280, 7
    %v282 = vsub.s32 0, %v281
    %v283 = vrot.slane %v278, %v282
    %v301 = vunpack.c.l.b16 %v262
    %v302 = vunpack.c.l.b16 %v263
    %v303 = vunpack.c.l.b16 %v264
    %v304 = vunpack.c.l.b16 %v265
    %v305 = vunpack.c.l.b16 %v266
    %v306 = vunpack.c.l.b16 %v267
    %v307 = vunpack.c.l.b16 %v268
    %v308 = vunpack.c.l.b16 %v269
    %v309 = vunpack.c.l.b16 %v270
    %v310 = vunpack.c.l.b16 %v271
    %v311 = vunpack.c.l.b16 %v272
    %v312 = vunpack.c.l.b16 %v273
    %v313 = vunpack.c.l.b16 %v274
    %v314 = vunpack.c.l.b16 %v275
    %v315 = vunpack.c.l.b16 %v276
    %v316 = vunpack.c.l.b16 %v277
    %v317 = vpack.c.b16 %v302, %v301
    %v318 = vpack.c.b16 %v304, %v303
    %v319 = vpack.c.b16 %v306, %v305
    %v320 = vpack.c.b16 %v308, %v307
    %v321 = vpack.c.b16 %v310, %v309
    %v322 = vpack.c.b16 %v312, %v311
    %v323 = vpack.c.b16 %v314, %v313
    %v324 = vpack.c.b16 %v316, %v315
    %333 = vmatprep.subr.bf16.mxu0 0
    %334 = vmatpush1.bf16.msra.mxu0 %v324
    %335 = vmatprep.subr.bf16.mxu0 0
    %336 = vmatpush1.bf16.msra.mxu0 %v323
    %337 = vmatprep.subr.bf16.mxu0 0
    %338 = vmatpush1.bf16.msra.mxu0 %v322
    %339 = vmatprep.subr.bf16.mxu0 0
    %340 = vmatpush1.bf16.msra.mxu0 %v321
    %341 = vmatprep.subr.bf16.mxu0 0
    %342 = vmatpush1.bf16.msra.mxu0 %v320
    %343 = vmatprep.subr.bf16.mxu0 0
    %344 = vmatpush1.bf16.msra.mxu0 %v319
    %345 = vmatprep.subr.bf16.mxu0 0
    %346 = vmatpush1.bf16.msra.mxu0 %v318
    %347 = vmatprep.subr.bf16.mxu0 0
    %348 = vmatpush1.bf16.msra.mxu0 %v317
    %349 = vmatprep.subr.bf16.mxu0 0
    %350 = vmatpush2.bf16.msra.mxu0 0
    %351 = vmatprep.subr.bf16.mxu0 0
    %352 = vmatpush2.bf16.msra.mxu0 0
    %353 = vmatprep.subr.bf16.mxu0 0
    %354 = vmatpush2.bf16.msra.mxu0 0
    %355 = vmatprep.subr.bf16.mxu0 0
    %356 = vmatpush2.bf16.msra.mxu0 0
    %357 = vmatprep.subr.bf16.mxu0 0
    %358 = vmatpush2.bf16.msra.mxu0 0
    %359 = vmatprep.subr.bf16.mxu0 0
    %360 = vmatpush2.bf16.msra.mxu0 0
    %361 = vmatprep.subr.bf16.mxu0 0
    %362 = vmatpush2.bf16.msra.mxu0 0
    %363 = vmatprep.subr.bf16.mxu0 0
    %364 = vmatpush2.bf16.msra.mxu0 0
    %365 = vmatprep.mubr.bf16.mxu0 0
    %366 = vmatmul.mubr.bf16.gmra.mxu0 %v254
    %v367 = vpop.f32.mrf.mxu0
    %v368 = vadd.f32 %v283, %v367
    %v369 = vpop.f32.mrf.mxu0
    %v370 = vpop.f32.mrf.mxu0
    %v371 = vadd.f32 %v283, %v370
    %v372 = vpop.f32.mrf.mxu0
    %373 = vmatprep.mubr.bf16.mxu0 0
    %374 = vmatmul.mubr.bf16.gmra.mxu0 %v255
    %v375 = vpop.f32.mrf.mxu0
    %v376 = vadd.f32 %v283, %v375
    %v377 = vpop.f32.mrf.mxu0
    %v378 = vpop.f32.mrf.mxu0
    %v379 = vadd.f32 %v283, %v378
    %v380 = vpop.f32.mrf.mxu0
    %381 = vmatprep.mubr.bf16.mxu0 0
    %382 = vmatmul.mubr.bf16.gmra.mxu0 %v256
    %v383 = vpop.f32.mrf.mxu0
    %v384 = vadd.f32 %v283, %v383
    %v385 = vpop.f32.mrf.mxu0
    %v386 = vpop.f32.mrf.mxu0
    %v387 = vadd.f32 %v283, %v386
    %v388 = vpop.f32.mrf.mxu0
    %389 = vmatprep.mubr.bf16.mxu0 0
    %390 = vmatmul.mubr.bf16.gmra.mxu0 %v257
    %v391 = vpop.f32.mrf.mxu0
    %v392 = vadd.f32 %v283, %v391
    %v393 = vpop.f32.mrf.mxu0
    %v394 = vpop.f32.mrf.mxu0
    %v395 = vadd.f32 %v283, %v394
    %v396 = vpop.f32.mrf.mxu0
    %397 = vmatprep.mubr.bf16.mxu0 0
    %398 = vmatmul.mubr.bf16.gmra.mxu0 %v258
    %v399 = vpop.f32.mrf.mxu0
    %v400 = vadd.f32 %v283, %v399
    %v401 = vpop.f32.mrf.mxu0
    %v402 = vpop.f32.mrf.mxu0
    %v403 = vadd.f32 %v283, %v402
    %v404 = vpop.f32.mrf.mxu0
    %405 = vmatprep.mubr.bf16.mxu0 0
    %406 = vmatmul.mubr.bf16.gmra.mxu0 %v259
    %v407 = vpop.f32.mrf.mxu0
    %v408 = vadd.f32 %v283, %v407
    %v409 = vpop.f32.mrf.mxu0
    %v410 = vpop.f32.mrf.mxu0
    %v411 = vadd.f32 %v283, %v410
    %v412 = vpop.f32.mrf.mxu0
    %413 = vmatprep.mubr.bf16.mxu0 0
    %414 = vmatmul.mubr.bf16.gmra.mxu0 %v260
    %v415 = vpop.f32.mrf.mxu0
    %v416 = vadd.f32 %v283, %v415
    %v417 = vpop.f32.mrf.mxu0
    %v418 = vpop.f32.mrf.mxu0
    %v419 = vadd.f32 %v283, %v418
    %v420 = vpop.f32.mrf.mxu0
    %421 = vmatprep.mubr.bf16.mxu0 0
    %422 = vmatmul.mubr.bf16.gmra.mxu0 %v261
    %v423 = vpop.f32.mrf.mxu0
    %v424 = vadd.f32 %v283, %v423
    %v425 = vpop.f32.mrf.mxu0
    %v426 = vpop.f32.mrf.mxu0
    %v427 = vadd.f32 %v283, %v426
    %v428 = vpop.f32.mrf.mxu0
    %429 = vdwg.mxu0
    %v430 = vmax.f32 %v368, 0.0
    %v431 = vmax.f32 %v371, 0.0
    %v432 = vmax.f32 %v376, 0.0
    %v433 = vmax.f32 %v379, 0.0
    %v434 = vmax.f32 %v384, 0.0
    %v435 = vmax.f32 %v387, 0.0
    %v436 = vmax.f32 %v392, 0.0
    %v437 = vmax.f32 %v395, 0.0
    %v438 = vmax.f32 %v400, 0.0
    %v439 = vmax.f32 %v403, 0.0
    %v440 = vmax.f32 %v408, 0.0
    %v441 = vmax.f32 %v411, 0.0
    %v442 = vmax.f32 %v416, 0.0
    %v443 = vmax.f32 %v419, 0.0
    %v444 = vmax.f32 %v424, 0.0
    %v445 = vmax.f32 %v427, 0.0
    %v446 = vpack.c.bf16 %v431, %v430
    %v447 = vpack.c.bf16 %v433, %v432
    %v448 = vpack.c.bf16 %v435, %v434
    %v449 = vpack.c.bf16 %v437, %v436
    %v450 = vpack.c.bf16 %v439, %v438
    %v451 = vpack.c.bf16 %v441, %v440
    %v452 = vpack.c.bf16 %v443, %v442
    %v453 = vpack.c.bf16 %v445, %v444
    %v454 = vld [vmem:[#allocation2] sm:$0xf]
    %v455 = vld [vmem:[#allocation2 + $0x4] sm:$0xf]
    %v456 = vld [vmem:[#allocation2 + $0x8] sm:$0xf]
    %v457 = vld [vmem:[#allocation2 + $0xc] sm:$0xf]
    %v458 = vld [vmem:[#allocation2 + $0x10] sm:$0xf]
    %v459 = vld [vmem:[#allocation2 + $0x14] sm:$0xf]
    %v460 = vld [vmem:[#allocation2 + $0x18] sm:$0xf]
    %v461 = vld [vmem:[#allocation2 + $0x1c] sm:$0xf]
    %v462 = vld [vmem:[#allocation2 + $0x20] sm:$0xf]
    %v463 = vld [vmem:[#allocation2 + $0x24] sm:$0xf]
    %v464 = vld [vmem:[#allocation2 + $0x28] sm:$0xf]
    %v465 = vld [vmem:[#allocation2 + $0x2c] sm:$0xf]
    %v466 = vld [vmem:[#allocation2 + $0x30] sm:$0xf]
    %v467 = vld [vmem:[#allocation2 + $0x34] sm:$0xf]
    %v468 = vld [vmem:[#allocation2 + $0x38] sm:$0xf]
    %v469 = vld [vmem:[#allocation2 + $0x3c] sm:$0xf]
    %v470 = vld [vmem:[#allocation4 + $0x1] sm:$0x1]
    %v472 = vlaneseq
    %v473 = vshrl.u32 %v472, 7
    %v474 = vsub.s32 0, %v473
    %v475 = vrot.slane %v470, %v474
    %v493 = vunpack.c.l.b16 %v454
    %v494 = vunpack.c.l.b16 %v455
    %v495 = vunpack.c.l.b16 %v456
    %v496 = vunpack.c.l.b16 %v457
    %v497 = vunpack.c.l.b16 %v458
    %v498 = vunpack.c.l.b16 %v459
    %v499 = vunpack.c.l.b16 %v460
    %v500 = vunpack.c.l.b16 %v461
    %v501 = vunpack.c.l.b16 %v462
    %v502 = vunpack.c.l.b16 %v463
    %v503 = vunpack.c.l.b16 %v464
    %v504 = vunpack.c.l.b16 %v465
    %v505 = vunpack.c.l.b16 %v466
    %v506 = vunpack.c.l.b16 %v467
    %v507 = vunpack.c.l.b16 %v468
    %v508 = vunpack.c.l.b16 %v469
    %v509 = vpack.c.b16 %v494, %v493
    %v510 = vpack.c.b16 %v496, %v495
    %v511 = vpack.c.b16 %v498, %v497
    %v512 = vpack.c.b16 %v500, %v499
    %v513 = vpack.c.b16 %v502, %v501
    %v514 = vpack.c.b16 %v504, %v503
    %v515 = vpack.c.b16 %v506, %v505
    %v516 = vpack.c.b16 %v508, %v507
    %525 = vmatprep.subr.bf16.mxu0 0
    %526 = vmatpush1.bf16.msra.mxu0 %v516
    %527 = vmatprep.subr.bf16.mxu0 0
    %528 = vmatpush1.bf16.msra.mxu0 %v515
    %529 = vmatprep.subr.bf16.mxu0 0
    %530 = vmatpush1.bf16.msra.mxu0 %v514
    %531 = vmatprep.subr.bf16.mxu0 0
    %532 = vmatpush1.bf16.msra.mxu0 %v513
    %533 = vmatprep.subr.bf16.mxu0 0
    %534 = vmatpush1.bf16.msra.mxu0 %v512
    %535 = vmatprep.subr.bf16.mxu0 0
    %536 = vmatpush1.bf16.msra.mxu0 %v511
    %537 = vmatprep.subr.bf16.mxu0 0
    %538 = vmatpush1.bf16.msra.mxu0 %v510
    %539 = vmatprep.subr.bf16.mxu0 0
    %540 = vmatpush1.bf16.msra.mxu0 %v509
    %541 = vmatprep.subr.bf16.mxu0 0
    %542 = vmatpush2.bf16.msra.mxu0 0
    %543 = vmatprep.subr.bf16.mxu0 0
    %544 = vmatpush2.bf16.msra.mxu0 0
    %545 = vmatprep.subr.bf16.mxu0 0
    %546 = vmatpush2.bf16.msra.mxu0 0
    %547 = vmatprep.subr.bf16.mxu0 0
    %548 = vmatpush2.bf16.msra.mxu0 0
    %549 = vmatprep.subr.bf16.mxu0 0
    %550 = vmatpush2.bf16.msra.mxu0 0
    %551 = vmatprep.subr.bf16.mxu0 0
    %552 = vmatpush2.bf16.msra.mxu0 0
    %553 = vmatprep.subr.bf16.mxu0 0
    %554 = vmatpush2.bf16.msra.mxu0 0
    %555 = vmatprep.subr.bf16.mxu0 0
    %556 = vmatpush2.bf16.msra.mxu0 0
    %557 = vmatprep.mubr.bf16.mxu0 0
    %558 = vmatmul.mubr.bf16.gmra.mxu0 %v446
    %v559 = vpop.f32.mrf.mxu0
    %v560 = vadd.f32 %v475, %v559
    %v561 = vpop.f32.mrf.mxu0
    %v562 = vpop.f32.mrf.mxu0
    %v563 = vadd.f32 %v475, %v562
    %v564 = vpop.f32.mrf.mxu0
    %565 = vmatprep.mubr.bf16.mxu0 0
    %566 = vmatmul.mubr.bf16.gmra.mxu0 %v447
    %v567 = vpop.f32.mrf.mxu0
    %v568 = vadd.f32 %v475, %v567
    %v569 = vpop.f32.mrf.mxu0
    %v570 = vpop.f32.mrf.mxu0
    %v571 = vadd.f32 %v475, %v570
    %v572 = vpop.f32.mrf.mxu0
    %573 = vmatprep.mubr.bf16.mxu0 0
    %574 = vmatmul.mubr.bf16.gmra.mxu0 %v448
    %v575 = vpop.f32.mrf.mxu0
    %v576 = vadd.f32 %v475, %v575
    %v577 = vpop.f32.mrf.mxu0
    %v578 = vpop.f32.mrf.mxu0
    %v579 = vadd.f32 %v475, %v578
    %v580 = vpop.f32.mrf.mxu0
    %581 = vmatprep.mubr.bf16.mxu0 0
    %582 = vmatmul.mubr.bf16.gmra.mxu0 %v449
    %v583 = vpop.f32.mrf.mxu0
    %v584 = vadd.f32 %v475, %v583
    %v585 = vpop.f32.mrf.mxu0
    %v586 = vpop.f32.mrf.mxu0
    %v587 = vadd.f32 %v475, %v586
    %v588 = vpop.f32.mrf.mxu0
    %589 = vmatprep.mubr.bf16.mxu0 0
    %590 = vmatmul.mubr.bf16.gmra.mxu0 %v450
    %v591 = vpop.f32.mrf.mxu0
    %v592 = vadd.f32 %v475, %v591
    %v593 = vpop.f32.mrf.mxu0
    %v594 = vpop.f32.mrf.mxu0
    %v595 = vadd.f32 %v475, %v594
    %v596 = vpop.f32.mrf.mxu0
    %597 = vmatprep.mubr.bf16.mxu0 0
    %598 = vmatmul.mubr.bf16.gmra.mxu0 %v451
    %v599 = vpop.f32.mrf.mxu0
    %v600 = vadd.f32 %v475, %v599
    %v601 = vpop.f32.mrf.mxu0
    %v602 = vpop.f32.mrf.mxu0
    %v603 = vadd.f32 %v475, %v602
    %v604 = vpop.f32.mrf.mxu0
    %605 = vmatprep.mubr.bf16.mxu0 0
    %606 = vmatmul.mubr.bf16.gmra.mxu0 %v452
    %v607 = vpop.f32.mrf.mxu0
    %v608 = vadd.f32 %v475, %v607
    %v609 = vpop.f32.mrf.mxu0
    %v610 = vpop.f32.mrf.mxu0
    %v611 = vadd.f32 %v475, %v610
    %v612 = vpop.f32.mrf.mxu0
    %613 = vmatprep.mubr.bf16.mxu0 0
    %614 = vmatmul.mubr.bf16.gmra.mxu0 %v453
    %v615 = vpop.f32.mrf.mxu0
    %v616 = vadd.f32 %v475, %v615
    %v617 = vpop.f32.mrf.mxu0
    %v618 = vpop.f32.mrf.mxu0
    %v619 = vadd.f32 %v475, %v618
    %v620 = vpop.f32.mrf.mxu0
    %621 = vdwg.mxu0
    %v622 = vmax.f32 %v560, 0.0
    %v623 = vmax.f32 %v563, 0.0
    %v624 = vmax.f32 %v568, 0.0
    %v625 = vmax.f32 %v571, 0.0
    %v626 = vmax.f32 %v576, 0.0
    %v627 = vmax.f32 %v579, 0.0
    %v628 = vmax.f32 %v584, 0.0
    %v629 = vmax.f32 %v587, 0.0
    %v630 = vmax.f32 %v592, 0.0
    %v631 = vmax.f32 %v595, 0.0
    %v632 = vmax.f32 %v600, 0.0
    %v633 = vmax.f32 %v603, 0.0
    %v634 = vmax.f32 %v608, 0.0
    %v635 = vmax.f32 %v611, 0.0
    %v636 = vmax.f32 %v616, 0.0
    %v637 = vmax.f32 %v619, 0.0
    %v638 = vpack.c.bf16 %v623, %v622
    %v639 = vpack.c.bf16 %v625, %v624
    %v640 = vpack.c.bf16 %v627, %v626
    %v641 = vpack.c.bf16 %v629, %v628
    %v642 = vpack.c.bf16 %v631, %v630
    %v643 = vpack.c.bf16 %v633, %v632
    %v644 = vpack.c.bf16 %v635, %v634
    %v645 = vpack.c.bf16 %v637, %v636
    %646 = vmatprep.subr.bf16.mxu0 0
    %647 = vmatpush1.bf16.msra.mxu0 %v645
    %648 = vmatprep.subr.bf16.mxu0 0
    %649 = vmatpush1.bf16.msra.mxu0 %v644
    %650 = vmatprep.subr.bf16.mxu0 0
    %651 = vmatpush1.bf16.msra.mxu0 %v643
    %652 = vmatprep.subr.bf16.mxu0 0
    %653 = vmatpush1.bf16.msra.mxu0 %v642
    %654 = vmatprep.subr.bf16.mxu0 0
    %655 = vmatpush1.bf16.msra.mxu0 %v641
    %656 = vmatprep.subr.bf16.mxu0 0
    %657 = vmatpush1.bf16.msra.mxu0 %v640
    %658 = vmatprep.subr.bf16.mxu0 0
    %659 = vmatpush1.bf16.msra.mxu0 %v639
    %660 = vmatprep.subr.bf16.mxu0 0
    %661 = vmatpush1.bf16.msra.mxu0 %v638
    %662 = vmatprep.subr.bf16.mxu0 0
    %663 = vmatpush2.bf16.msra.mxu0 0
    %664 = vmatprep.subr.bf16.mxu0 0
    %665 = vmatpush2.bf16.msra.mxu0 0
    %666 = vmatprep.subr.bf16.mxu0 0
    %667 = vmatpush2.bf16.msra.mxu0 0
    %668 = vmatprep.subr.bf16.mxu0 0
    %669 = vmatpush2.bf16.msra.mxu0 0
    %670 = vmatprep.subr.bf16.mxu0 0
    %671 = vmatpush2.bf16.msra.mxu0 0
    %672 = vmatprep.subr.bf16.mxu0 0
    %673 = vmatpush2.bf16.msra.mxu0 0
    %674 = vmatprep.subr.bf16.mxu0 0
    %675 = vmatpush2.bf16.msra.mxu0 0
    %676 = vmatprep.subr.bf16.mxu0 0
    %677 = vmatpush2.bf16.msra.mxu0 0
    %678 = vmatprep.mubr.bf16.mxu0 0
    %679 = vmatmul.mubr.bf16.gmra.mxu0 %v141
    %v680 = vpop.f32.mrf.mxu0
    %v681 = vadd.f32 0.0, %v680
    %v682 = vpop.f32.mrf.mxu0
    %v683 = vpop.f32.mrf.mxu0
    %v684 = vadd.f32 0.0, %v683
    %v685 = vpop.f32.mrf.mxu0
    %686 = vmatprep.mubr.bf16.mxu0 0
    %687 = vmatmul.mubr.bf16.gmra.mxu0 %v142
    %v688 = vpop.f32.mrf.mxu0
    %v689 = vadd.f32 0.0, %v688
    %v690 = vpop.f32.mrf.mxu0
    %v691 = vpop.f32.mrf.mxu0
    %v692 = vadd.f32 0.0, %v691
    %v693 = vpop.f32.mrf.mxu0
    %694 = vmatprep.mubr.bf16.mxu0 0
    %695 = vmatmul.mubr.bf16.gmra.mxu0 %v143
    %v696 = vpop.f32.mrf.mxu0
    %v697 = vadd.f32 0.0, %v696
    %v698 = vpop.f32.mrf.mxu0
    %v699 = vpop.f32.mrf.mxu0
    %v700 = vadd.f32 0.0, %v699
    %v701 = vpop.f32.mrf.mxu0
    %702 = vmatprep.mubr.bf16.mxu0 0
    %703 = vmatmul.mubr.bf16.gmra.mxu0 %v144
    %v704 = vpop.f32.mrf.mxu0
    %v705 = vadd.f32 0.0, %v704
    %v706 = vpop.f32.mrf.mxu0
    %v707 = vpop.f32.mrf.mxu0
    %v708 = vadd.f32 0.0, %v707
    %v709 = vpop.f32.mrf.mxu0
    %710 = vmatprep.mubr.bf16.mxu0 0
    %711 = vmatmul.mubr.bf16.gmra.mxu0 %v145
    %v712 = vpop.f32.mrf.mxu0
    %v713 = vadd.f32 0.0, %v712
    %v714 = vpop.f32.mrf.mxu0
    %v715 = vpop.f32.mrf.mxu0
    %v716 = vadd.f32 0.0, %v715
    %v717 = vpop.f32.mrf.mxu0
    %718 = vmatprep.mubr.bf16.mxu0 0
    %719 = vmatmul.mubr.bf16.gmra.mxu0 %v146
    %v720 = vpop.f32.mrf.mxu0
    %v721 = vadd.f32 0.0, %v720
    %v722 = vpop.f32.mrf.mxu0
    %v723 = vpop.f32.mrf.mxu0
    %v724 = vadd.f32 0.0, %v723
    %v725 = vpop.f32.mrf.mxu0
    %726 = vmatprep.mubr.bf16.mxu0 0
    %727 = vmatmul.mubr.bf16.gmra.mxu0 %v147
    %v728 = vpop.f32.mrf.mxu0
    %v729 = vadd.f32 0.0, %v728
    %v730 = vpop.f32.mrf.mxu0
    %v731 = vpop.f32.mrf.mxu0
    %v732 = vadd.f32 0.0, %v731
    %v733 = vpop.f32.mrf.mxu0
    %734 = vmatprep.mubr.bf16.mxu0 0
    %735 = vmatmul.mubr.bf16.gmra.mxu0 %v148
    %v736 = vpop.f32.mrf.mxu0
    %v737 = vadd.f32 0.0, %v736
    %v738 = vpop.f32.mrf.mxu0
    %v739 = vpop.f32.mrf.mxu0
    %v740 = vadd.f32 0.0, %v739
    %v741 = vpop.f32.mrf.mxu0
    %742 = vdwg.mxu0
    %v743 = vpack.c.bf16 %v684, %v681
    %v744 = vpack.c.bf16 %v692, %v689
    %v745 = vpack.c.bf16 %v700, %v697
    %v746 = vpack.c.bf16 %v708, %v705
    %v747 = vpack.c.bf16 %v716, %v713
    %v748 = vpack.c.bf16 %v724, %v721
    %v749 = vpack.c.bf16 %v732, %v729
    %v750 = vpack.c.bf16 %v740, %v737
    %s751 = scalar_lea.vmem %s3, 64
    %v752 = vld [vmem:[%s751] sm:$0xf]
    %v753 = vld [vmem:[%s751 + $0x4] sm:$0xf]
    %v754 = vld [vmem:[%s751 + $0x8] sm:$0xf]
    %v755 = vld [vmem:[%s751 + $0xc] sm:$0xf]
    %v756 = vld [vmem:[%s751 + $0x10] sm:$0xf]
    %v757 = vld [vmem:[%s751 + $0x14] sm:$0xf]
    %v758 = vld [vmem:[%s751 + $0x18] sm:$0xf]
    %v759 = vld [vmem:[%s751 + $0x1c] sm:$0xf]
    %v760 = vld [vmem:[%s751 + $0x20] sm:$0xf]
    %v761 = vld [vmem:[%s751 + $0x24] sm:$0xf]
    %v762 = vld [vmem:[%s751 + $0x28] sm:$0xf]
    %v763 = vld [vmem:[%s751 + $0x2c] sm:$0xf]
    %v764 = vld [vmem:[%s751 + $0x30] sm:$0xf]
    %v765 = vld [vmem:[%s751 + $0x34] sm:$0xf]
    %v766 = vld [vmem:[%s751 + $0x38] sm:$0xf]
    %v767 = vld [vmem:[%s751 + $0x3c] sm:$0xf]
    %v768 = vld [vmem:[#allocation4 + $0x2] sm:$0x1]
    %v770 = vlaneseq
    %v771 = vshrl.u32 %v770, 7
    %v772 = vsub.s32 0, %v771
    %v773 = vrot.slane %v768, %v772
    %v791 = vunpack.c.l.b16 %v752
    %v792 = vunpack.c.l.b16 %v753
    %v793 = vunpack.c.l.b16 %v754
    %v794 = vunpack.c.l.b16 %v755
    %v795 = vunpack.c.l.b16 %v756
    %v796 = vunpack.c.l.b16 %v757
    %v797 = vunpack.c.l.b16 %v758
    %v798 = vunpack.c.l.b16 %v759
    %v799 = vunpack.c.l.b16 %v760
    %v800 = vunpack.c.l.b16 %v761
    %v801 = vunpack.c.l.b16 %v762
    %v802 = vunpack.c.l.b16 %v763
    %v803 = vunpack.c.l.b16 %v764
    %v804 = vunpack.c.l.b16 %v765
    %v805 = vunpack.c.l.b16 %v766
    %v806 = vunpack.c.l.b16 %v767
    %v807 = vpack.c.b16 %v792, %v791
    %v808 = vpack.c.b16 %v794, %v793
    %v809 = vpack.c.b16 %v796, %v795
    %v810 = vpack.c.b16 %v798, %v797
    %v811 = vpack.c.b16 %v800, %v799
    %v812 = vpack.c.b16 %v802, %v801
    %v813 = vpack.c.b16 %v804, %v803
    %v814 = vpack.c.b16 %v806, %v805
    %823 = vmatprep.subr.bf16.mxu0 0
    %824 = vmatpush1.bf16.msra.mxu0 %v814
    %825 = vmatprep.subr.bf16.mxu0 0
    %826 = vmatpush1.bf16.msra.mxu0 %v813
    %827 = vmatprep.subr.bf16.mxu0 0
    %828 = vmatpush1.bf16.msra.mxu0 %v812
    %829 = vmatprep.subr.bf16.mxu0 0
    %830 = vmatpush1.bf16.msra.mxu0 %v811
    %831 = vmatprep.subr.bf16.mxu0 0
    %832 = vmatpush1.bf16.msra.mxu0 %v810
    %833 = vmatprep.subr.bf16.mxu0 0
    %834 = vmatpush1.bf16.msra.mxu0 %v809
    %835 = vmatprep.subr.bf16.mxu0 0
    %836 = vmatpush1.bf16.msra.mxu0 %v808
    %837 = vmatprep.subr.bf16.mxu0 0
    %838 = vmatpush1.bf16.msra.mxu0 %v807
    %839 = vmatprep.subr.bf16.mxu0 0
    %840 = vmatpush2.bf16.msra.mxu0 0
    %841 = vmatprep.subr.bf16.mxu0 0
    %842 = vmatpush2.bf16.msra.mxu0 0
    %843 = vmatprep.subr.bf16.mxu0 0
    %844 = vmatpush2.bf16.msra.mxu0 0
    %845 = vmatprep.subr.bf16.mxu0 0
    %846 = vmatpush2.bf16.msra.mxu0 0
    %847 = vmatprep.subr.bf16.mxu0 0
    %848 = vmatpush2.bf16.msra.mxu0 0
    %849 = vmatprep.subr.bf16.mxu0 0
    %850 = vmatpush2.bf16.msra.mxu0 0
    %851 = vmatprep.subr.bf16.mxu0 0
    %852 = vmatpush2.bf16.msra.mxu0 0
    %853 = vmatprep.subr.bf16.mxu0 0
    %854 = vmatpush2.bf16.msra.mxu0 0
    %855 = vmatprep.mubr.bf16.mxu0 0
    %856 = vmatmul.mubr.bf16.gmra.mxu0 %v743
    %v857 = vpop.f32.mrf.mxu0
    %v858 = vadd.f32 %v773, %v857
    %v859 = vpop.f32.mrf.mxu0
    %v860 = vpop.f32.mrf.mxu0
    %v861 = vadd.f32 %v773, %v860
    %v862 = vpop.f32.mrf.mxu0
    %863 = vmatprep.mubr.bf16.mxu0 0
    %864 = vmatmul.mubr.bf16.gmra.mxu0 %v744
    %v865 = vpop.f32.mrf.mxu0
    %v866 = vadd.f32 %v773, %v865
    %v867 = vpop.f32.mrf.mxu0
    %v868 = vpop.f32.mrf.mxu0
    %v869 = vadd.f32 %v773, %v868
    %v870 = vpop.f32.mrf.mxu0
    %871 = vmatprep.mubr.bf16.mxu0 0
    %872 = vmatmul.mubr.bf16.gmra.mxu0 %v745
    %v873 = vpop.f32.mrf.mxu0
    %v874 = vadd.f32 %v773, %v873
    %v875 = vpop.f32.mrf.mxu0
    %v876 = vpop.f32.mrf.mxu0
    %v877 = vadd.f32 %v773, %v876
    %v878 = vpop.f32.mrf.mxu0
    %879 = vmatprep.mubr.bf16.mxu0 0
    %880 = vmatmul.mubr.bf16.gmra.mxu0 %v746
    %v881 = vpop.f32.mrf.mxu0
    %v882 = vadd.f32 %v773, %v881
    %v883 = vpop.f32.mrf.mxu0
    %v884 = vpop.f32.mrf.mxu0
    %v885 = vadd.f32 %v773, %v884
    %v886 = vpop.f32.mrf.mxu0
    %887 = vmatprep.mubr.bf16.mxu0 0
    %888 = vmatmul.mubr.bf16.gmra.mxu0 %v747
    %v889 = vpop.f32.mrf.mxu0
    %v890 = vadd.f32 %v773, %v889
    %v891 = vpop.f32.mrf.mxu0
    %v892 = vpop.f32.mrf.mxu0
    %v893 = vadd.f32 %v773, %v892
    %v894 = vpop.f32.mrf.mxu0
    %895 = vmatprep.mubr.bf16.mxu0 0
    %896 = vmatmul.mubr.bf16.gmra.mxu0 %v748
    %v897 = vpop.f32.mrf.mxu0
    %v898 = vadd.f32 %v773, %v897
    %v899 = vpop.f32.mrf.mxu0
    %v900 = vpop.f32.mrf.mxu0
    %v901 = vadd.f32 %v773, %v900
    %v902 = vpop.f32.mrf.mxu0
    %903 = vmatprep.mubr.bf16.mxu0 0
    %904 = vmatmul.mubr.bf16.gmra.mxu0 %v749
    %v905 = vpop.f32.mrf.mxu0
    %v906 = vadd.f32 %v773, %v905
    %v907 = vpop.f32.mrf.mxu0
    %v908 = vpop.f32.mrf.mxu0
    %v909 = vadd.f32 %v773, %v908
    %v910 = vpop.f32.mrf.mxu0
    %911 = vmatprep.mubr.bf16.mxu0 0
    %912 = vmatmul.mubr.bf16.gmra.mxu0 %v750
    %v913 = vpop.f32.mrf.mxu0
    %v914 = vadd.f32 %v773, %v913
    %v915 = vpop.f32.mrf.mxu0
    %v916 = vpop.f32.mrf.mxu0
    %v917 = vadd.f32 %v773, %v916
    %v918 = vpop.f32.mrf.mxu0
    %919 = vdwg.mxu0
    %v920 = vmax.f32 %v858, 0.0
    %v921 = vmax.f32 %v861, 0.0
    %v922 = vmax.f32 %v866, 0.0
    %v923 = vmax.f32 %v869, 0.0
    %v924 = vmax.f32 %v874, 0.0
    %v925 = vmax.f32 %v877, 0.0
    %v926 = vmax.f32 %v882, 0.0
    %v927 = vmax.f32 %v885, 0.0
    %v928 = vmax.f32 %v890, 0.0
    %v929 = vmax.f32 %v893, 0.0
    %v930 = vmax.f32 %v898, 0.0
    %v931 = vmax.f32 %v901, 0.0
    %v932 = vmax.f32 %v906, 0.0
    %v933 = vmax.f32 %v909, 0.0
    %v934 = vmax.f32 %v914, 0.0
    %v935 = vmax.f32 %v917, 0.0
    %v936 = vpack.c.bf16 %v921, %v920
    %v937 = vpack.c.bf16 %v923, %v922
    %v938 = vpack.c.bf16 %v925, %v924
    %v939 = vpack.c.bf16 %v927, %v926
    %v940 = vpack.c.bf16 %v929, %v928
    %v941 = vpack.c.bf16 %v931, %v930
    %v942 = vpack.c.bf16 %v933, %v932
    %v943 = vpack.c.bf16 %v935, %v934
    %s944 = scalar_lea.vmem [#allocation2], 64
    %v945 = vld [vmem:[%s944] sm:$0xf]
    %v946 = vld [vmem:[%s944 + $0x4] sm:$0xf]
    %v947 = vld [vmem:[%s944 + $0x8] sm:$0xf]
    %v948 = vld [vmem:[%s944 + $0xc] sm:$0xf]
    %v949 = vld [vmem:[%s944 + $0x10] sm:$0xf]
    %v950 = vld [vmem:[%s944 + $0x14] sm:$0xf]
    %v951 = vld [vmem:[%s944 + $0x18] sm:$0xf]
    %v952 = vld [vmem:[%s944 + $0x1c] sm:$0xf]
    %v953 = vld [vmem:[%s944 + $0x20] sm:$0xf]
    %v954 = vld [vmem:[%s944 + $0x24] sm:$0xf]
    %v955 = vld [vmem:[%s944 + $0x28] sm:$0xf]
    %v956 = vld [vmem:[%s944 + $0x2c] sm:$0xf]
    %v957 = vld [vmem:[%s944 + $0x30] sm:$0xf]
    %v958 = vld [vmem:[%s944 + $0x34] sm:$0xf]
    %v959 = vld [vmem:[%s944 + $0x38] sm:$0xf]
    %v960 = vld [vmem:[%s944 + $0x3c] sm:$0xf]
    %v961 = vld [vmem:[#allocation4 + $0x3] sm:$0x1]
    %v963 = vlaneseq
    %v964 = vshrl.u32 %v963, 7
    %v965 = vsub.s32 0, %v964
    %v966 = vrot.slane %v961, %v965
    %v984 = vunpack.c.l.b16 %v945
    %v985 = vunpack.c.l.b16 %v946
    %v986 = vunpack.c.l.b16 %v947
    %v987 = vunpack.c.l.b16 %v948
    %v988 = vunpack.c.l.b16 %v949
    %v989 = vunpack.c.l.b16 %v950
    %v990 = vunpack.c.l.b16 %v951
    %v991 = vunpack.c.l.b16 %v952
    %v992 = vunpack.c.l.b16 %v953
    %v993 = vunpack.c.l.b16 %v954
    %v994 = vunpack.c.l.b16 %v955
    %v995 = vunpack.c.l.b16 %v956
    %v996 = vunpack.c.l.b16 %v957
    %v997 = vunpack.c.l.b16 %v958
    %v998 = vunpack.c.l.b16 %v959
    %v999 = vunpack.c.l.b16 %v960
    %v1000 = vpack.c.b16 %v985, %v984
    %v1001 = vpack.c.b16 %v987, %v986
    %v1002 = vpack.c.b16 %v989, %v988
    %v1003 = vpack.c.b16 %v991, %v990
    %v1004 = vpack.c.b16 %v993, %v992
    %v1005 = vpack.c.b16 %v995, %v994
    %v1006 = vpack.c.b16 %v997, %v996
    %v1007 = vpack.c.b16 %v999, %v998
    %1016 = vmatprep.subr.bf16.mxu0 0
    %1017 = vmatpush1.bf16.msra.mxu0 %v1007
    %1018 = vmatprep.subr.bf16.mxu0 0
    %1019 = vmatpush1.bf16.msra.mxu0 %v1006
    %1020 = vmatprep.subr.bf16.mxu0 0
    %1021 = vmatpush1.bf16.msra.mxu0 %v1005
    %1022 = vmatprep.subr.bf16.mxu0 0
    %1023 = vmatpush1.bf16.msra.mxu0 %v1004
    %1024 = vmatprep.subr.bf16.mxu0 0
    %1025 = vmatpush1.bf16.msra.mxu0 %v1003
    %1026 = vmatprep.subr.bf16.mxu0 0
    %1027 = vmatpush1.bf16.msra.mxu0 %v1002
    %1028 = vmatprep.subr.bf16.mxu0 0
    %1029 = vmatpush1.bf16.msra.mxu0 %v1001
    %1030 = vmatprep.subr.bf16.mxu0 0
    %1031 = vmatpush1.bf16.msra.mxu0 %v1000
    %1032 = vmatprep.subr.bf16.mxu0 0
    %1033 = vmatpush2.bf16.msra.mxu0 0
    %1034 = vmatprep.subr.bf16.mxu0 0
    %1035 = vmatpush2.bf16.msra.mxu0 0
    %1036 = vmatprep.subr.bf16.mxu0 0
    %1037 = vmatpush2.bf16.msra.mxu0 0
    %1038 = vmatprep.subr.bf16.mxu0 0
    %1039 = vmatpush2.bf16.msra.mxu0 0
    %1040 = vmatprep.subr.bf16.mxu0 0
    %1041 = vmatpush2.bf16.msra.mxu0 0
    %1042 = vmatprep.subr.bf16.mxu0 0
    %1043 = vmatpush2.bf16.msra.mxu0 0
    %1044 = vmatprep.subr.bf16.mxu0 0
    %1045 = vmatpush2.bf16.msra.mxu0 0
    %1046 = vmatprep.subr.bf16.mxu0 0
    %1047 = vmatpush2.bf16.msra.mxu0 0
    %1048 = vmatprep.mubr.bf16.mxu0 0
    %1049 = vmatmul.mubr.bf16.gmra.mxu0 %v936
    %v1050 = vpop.f32.mrf.mxu0
    %v1051 = vadd.f32 %v966, %v1050
    %v1052 = vpop.f32.mrf.mxu0
    %v1053 = vpop.f32.mrf.mxu0
    %v1054 = vadd.f32 %v966, %v1053
    %v1055 = vpop.f32.mrf.mxu0
    %1056 = vmatprep.mubr.bf16.mxu0 0
    %1057 = vmatmul.mubr.bf16.gmra.mxu0 %v937
    %v1058 = vpop.f32.mrf.mxu0
    %v1059 = vadd.f32 %v966, %v1058
    %v1060 = vpop.f32.mrf.mxu0
    %v1061 = vpop.f32.mrf.mxu0
    %v1062 = vadd.f32 %v966, %v1061
    %v1063 = vpop.f32.mrf.mxu0
    %1064 = vmatprep.mubr.bf16.mxu0 0
    %1065 = vmatmul.mubr.bf16.gmra.mxu0 %v938
    %v1066 = vpop.f32.mrf.mxu0
    %v1067 = vadd.f32 %v966, %v1066
    %v1068 = vpop.f32.mrf.mxu0
    %v1069 = vpop.f32.mrf.mxu0
    %v1070 = vadd.f32 %v966, %v1069
    %v1071 = vpop.f32.mrf.mxu0
    %1072 = vmatprep.mubr.bf16.mxu0 0
    %1073 = vmatmul.mubr.bf16.gmra.mxu0 %v939
    %v1074 = vpop.f32.mrf.mxu0
    %v1075 = vadd.f32 %v966, %v1074
    %v1076 = vpop.f32.mrf.mxu0
    %v1077 = vpop.f32.mrf.mxu0
    %v1078 = vadd.f32 %v966, %v1077
    %v1079 = vpop.f32.mrf.mxu0
    %1080 = vmatprep.mubr.bf16.mxu0 0
    %1081 = vmatmul.mubr.bf16.gmra.mxu0 %v940
    %v1082 = vpop.f32.mrf.mxu0
    %v1083 = vadd.f32 %v966, %v1082
    %v1084 = vpop.f32.mrf.mxu0
    %v1085 = vpop.f32.mrf.mxu0
    %v1086 = vadd.f32 %v966, %v1085
    %v1087 = vpop.f32.mrf.mxu0
    %1088 = vmatprep.mubr.bf16.mxu0 0
    %1089 = vmatmul.mubr.bf16.gmra.mxu0 %v941
    %v1090 = vpop.f32.mrf.mxu0
    %v1091 = vadd.f32 %v966, %v1090
    %v1092 = vpop.f32.mrf.mxu0
    %v1093 = vpop.f32.mrf.mxu0
    %v1094 = vadd.f32 %v966, %v1093
    %v1095 = vpop.f32.mrf.mxu0
    %1096 = vmatprep.mubr.bf16.mxu0 0
    %1097 = vmatmul.mubr.bf16.gmra.mxu0 %v942
    %v1098 = vpop.f32.mrf.mxu0
    %v1099 = vadd.f32 %v966, %v1098
    %v1100 = vpop.f32.mrf.mxu0
    %v1101 = vpop.f32.mrf.mxu0
    %v1102 = vadd.f32 %v966, %v1101
    %v1103 = vpop.f32.mrf.mxu0
    %1104 = vmatprep.mubr.bf16.mxu0 0
    %1105 = vmatmul.mubr.bf16.gmra.mxu0 %v943
    %v1106 = vpop.f32.mrf.mxu0
    %v1107 = vadd.f32 %v966, %v1106
    %v1108 = vpop.f32.mrf.mxu0
    %v1109 = vpop.f32.mrf.mxu0
    %v1110 = vadd.f32 %v966, %v1109
    %v1111 = vpop.f32.mrf.mxu0
    %1112 = vdwg.mxu0
    %v1113 = vmax.f32 %v1051, 0.0
    %v1114 = vmax.f32 %v1054, 0.0
    %v1115 = vmax.f32 %v1059, 0.0
    %v1116 = vmax.f32 %v1062, 0.0
    %v1117 = vmax.f32 %v1067, 0.0
    %v1118 = vmax.f32 %v1070, 0.0
    %v1119 = vmax.f32 %v1075, 0.0
    %v1120 = vmax.f32 %v1078, 0.0
    %v1121 = vmax.f32 %v1083, 0.0
    %v1122 = vmax.f32 %v1086, 0.0
    %v1123 = vmax.f32 %v1091, 0.0
    %v1124 = vmax.f32 %v1094, 0.0
    %v1125 = vmax.f32 %v1099, 0.0
    %v1126 = vmax.f32 %v1102, 0.0
    %v1127 = vmax.f32 %v1107, 0.0
    %v1128 = vmax.f32 %v1110, 0.0
    %v1129 = vpack.c.bf16 %v1114, %v1113
    %v1130 = vpack.c.bf16 %v1116, %v1115
    %v1131 = vpack.c.bf16 %v1118, %v1117
    %v1132 = vpack.c.bf16 %v1120, %v1119
    %v1133 = vpack.c.bf16 %v1122, %v1121
    %v1134 = vpack.c.bf16 %v1124, %v1123
    %v1135 = vpack.c.bf16 %v1126, %v1125
    %v1136 = vpack.c.bf16 %v1128, %v1127
    %1137 = vmatprep.subr.bf16.mxu0 0
    %1138 = vmatpush1.bf16.msra.mxu0 %v1136
    %1139 = vmatprep.subr.bf16.mxu0 0
    %1140 = vmatpush1.bf16.msra.mxu0 %v1135
    %1141 = vmatprep.subr.bf16.mxu0 0
    %1142 = vmatpush1.bf16.msra.mxu0 %v1134
    %1143 = vmatprep.subr.bf16.mxu0 0
    %1144 = vmatpush1.bf16.msra.mxu0 %v1133
    %1145 = vmatprep.subr.bf16.mxu0 0
    %1146 = vmatpush1.bf16.msra.mxu0 %v1132
    %1147 = vmatprep.subr.bf16.mxu0 0
    %1148 = vmatpush1.bf16.msra.mxu0 %v1131
    %1149 = vmatprep.subr.bf16.mxu0 0
    %1150 = vmatpush1.bf16.msra.mxu0 %v1130
    %1151 = vmatprep.subr.bf16.mxu0 0
    %1152 = vmatpush1.bf16.msra.mxu0 %v1129
    %1153 = vmatprep.subr.bf16.mxu0 0
    %1154 = vmatpush2.bf16.msra.mxu0 0
    %1155 = vmatprep.subr.bf16.mxu0 0
    %1156 = vmatpush2.bf16.msra.mxu0 0
    %1157 = vmatprep.subr.bf16.mxu0 0
    %1158 = vmatpush2.bf16.msra.mxu0 0
    %1159 = vmatprep.subr.bf16.mxu0 0
    %1160 = vmatpush2.bf16.msra.mxu0 0
    %1161 = vmatprep.subr.bf16.mxu0 0
    %1162 = vmatpush2.bf16.msra.mxu0 0
    %1163 = vmatprep.subr.bf16.mxu0 0
    %1164 = vmatpush2.bf16.msra.mxu0 0
    %1165 = vmatprep.subr.bf16.mxu0 0
    %1166 = vmatpush2.bf16.msra.mxu0 0
    %1167 = vmatprep.subr.bf16.mxu0 0
    %1168 = vmatpush2.bf16.msra.mxu0 0
    %1169 = vmatprep.mubr.bf16.mxu0 0
    %1170 = vmatmul.mubr.bf16.gmra.mxu0 %v141
    %v1171 = vpop.f32.mrf.mxu0
    %v1172 = vadd.f32 0.0, %v1171
    %v1173 = vpop.f32.mrf.mxu0
    %v1174 = vpop.f32.mrf.mxu0
    %v1175 = vadd.f32 0.0, %v1174
    %v1176 = vpop.f32.mrf.mxu0
    %1177 = vmatprep.mubr.bf16.mxu0 0
    %1178 = vmatmul.mubr.bf16.gmra.mxu0 %v142
    %v1179 = vpop.f32.mrf.mxu0
    %v1180 = vadd.f32 0.0, %v1179
    %v1181 = vpop.f32.mrf.mxu0
    %v1182 = vpop.f32.mrf.mxu0
    %v1183 = vadd.f32 0.0, %v1182
    %v1184 = vpop.f32.mrf.mxu0
    %1185 = vmatprep.mubr.bf16.mxu0 0
    %1186 = vmatmul.mubr.bf16.gmra.mxu0 %v143
    %v1187 = vpop.f32.mrf.mxu0
    %v1188 = vadd.f32 0.0, %v1187
    %v1189 = vpop.f32.mrf.mxu0
    %v1190 = vpop.f32.mrf.mxu0
    %v1191 = vadd.f32 0.0, %v1190
    %v1192 = vpop.f32.mrf.mxu0
    %1193 = vmatprep.mubr.bf16.mxu0 0
    %1194 = vmatmul.mubr.bf16.gmra.mxu0 %v144
    %v1195 = vpop.f32.mrf.mxu0
    %v1196 = vadd.f32 0.0, %v1195
    %v1197 = vpop.f32.mrf.mxu0
    %v1198 = vpop.f32.mrf.mxu0
    %v1199 = vadd.f32 0.0, %v1198
    %v1200 = vpop.f32.mrf.mxu0
    %1201 = vmatprep.mubr.bf16.mxu0 0
    %1202 = vmatmul.mubr.bf16.gmra.mxu0 %v145
    %v1203 = vpop.f32.mrf.mxu0
    %v1204 = vadd.f32 0.0, %v1203
    %v1205 = vpop.f32.mrf.mxu0
    %v1206 = vpop.f32.mrf.mxu0
    %v1207 = vadd.f32 0.0, %v1206
    %v1208 = vpop.f32.mrf.mxu0
    %1209 = vmatprep.mubr.bf16.mxu0 0
    %1210 = vmatmul.mubr.bf16.gmra.mxu0 %v146
    %v1211 = vpop.f32.mrf.mxu0
    %v1212 = vadd.f32 0.0, %v1211
    %v1213 = vpop.f32.mrf.mxu0
    %v1214 = vpop.f32.mrf.mxu0
    %v1215 = vadd.f32 0.0, %v1214
    %v1216 = vpop.f32.mrf.mxu0
    %1217 = vmatprep.mubr.bf16.mxu0 0
    %1218 = vmatmul.mubr.bf16.gmra.mxu0 %v147
    %v1219 = vpop.f32.mrf.mxu0
    %v1220 = vadd.f32 0.0, %v1219
    %v1221 = vpop.f32.mrf.mxu0
    %v1222 = vpop.f32.mrf.mxu0
    %v1223 = vadd.f32 0.0, %v1222
    %v1224 = vpop.f32.mrf.mxu0
    %1225 = vmatprep.mubr.bf16.mxu0 0
    %1226 = vmatmul.mubr.bf16.gmra.mxu0 %v148
    %v1227 = vpop.f32.mrf.mxu0
    %v1228 = vadd.f32 0.0, %v1227
    %v1229 = vpop.f32.mrf.mxu0
    %v1230 = vpop.f32.mrf.mxu0
    %v1231 = vadd.f32 0.0, %v1230
    %v1232 = vpop.f32.mrf.mxu0
    %1233 = vdwg.mxu0
    %v1234 = vpack.c.bf16 %v1175, %v1172
    %v1235 = vpack.c.bf16 %v1183, %v1180
    %v1236 = vpack.c.bf16 %v1191, %v1188
    %v1237 = vpack.c.bf16 %v1199, %v1196
    %v1238 = vpack.c.bf16 %v1207, %v1204
    %v1239 = vpack.c.bf16 %v1215, %v1212
    %v1240 = vpack.c.bf16 %v1223, %v1220
    %v1241 = vpack.c.bf16 %v1231, %v1228
    %s1242 = scalar_lea.vmem %s3, 128
    %v1243 = vld [vmem:[%s1242] sm:$0xf]
    %v1244 = vld [vmem:[%s1242 + $0x4] sm:$0xf]
    %v1245 = vld [vmem:[%s1242 + $0x8] sm:$0xf]
    %v1246 = vld [vmem:[%s1242 + $0xc] sm:$0xf]
    %v1247 = vld [vmem:[%s1242 + $0x10] sm:$0xf]
    %v1248 = vld [vmem:[%s1242 + $0x14] sm:$0xf]
    %v1249 = vld [vmem:[%s1242 + $0x18] sm:$0xf]
    %v1250 = vld [vmem:[%s1242 + $0x1c] sm:$0xf]
    %v1251 = vld [vmem:[%s1242 + $0x20] sm:$0xf]
    %v1252 = vld [vmem:[%s1242 + $0x24] sm:$0xf]
    %v1253 = vld [vmem:[%s1242 + $0x28] sm:$0xf]
    %v1254 = vld [vmem:[%s1242 + $0x2c] sm:$0xf]
    %v1255 = vld [vmem:[%s1242 + $0x30] sm:$0xf]
    %v1256 = vld [vmem:[%s1242 + $0x34] sm:$0xf]
    %v1257 = vld [vmem:[%s1242 + $0x38] sm:$0xf]
    %v1258 = vld [vmem:[%s1242 + $0x3c] sm:$0xf]
    %v1259 = vld [vmem:[#allocation4 + $0x4] sm:$0x1]
    %v1261 = vlaneseq
    %v1262 = vshrl.u32 %v1261, 7
    %v1263 = vsub.s32 0, %v1262
    %v1264 = vrot.slane %v1259, %v1263
    %v1282 = vunpack.c.l.b16 %v1243
    %v1283 = vunpack.c.l.b16 %v1244
    %v1284 = vunpack.c.l.b16 %v1245
    %v1285 = vunpack.c.l.b16 %v1246
    %v1286 = vunpack.c.l.b16 %v1247
    %v1287 = vunpack.c.l.b16 %v1248
    %v1288 = vunpack.c.l.b16 %v1249
    %v1289 = vunpack.c.l.b16 %v1250
    %v1290 = vunpack.c.l.b16 %v1251
    %v1291 = vunpack.c.l.b16 %v1252
    %v1292 = vunpack.c.l.b16 %v1253
    %v1293 = vunpack.c.l.b16 %v1254
    %v1294 = vunpack.c.l.b16 %v1255
    %v1295 = vunpack.c.l.b16 %v1256
    %v1296 = vunpack.c.l.b16 %v1257
    %v1297 = vunpack.c.l.b16 %v1258
    %v1298 = vpack.c.b16 %v1283, %v1282
    %v1299 = vpack.c.b16 %v1285, %v1284
    %v1300 = vpack.c.b16 %v1287, %v1286
    %v1301 = vpack.c.b16 %v1289, %v1288
    %v1302 = vpack.c.b16 %v1291, %v1290
    %v1303 = vpack.c.b16 %v1293, %v1292
    %v1304 = vpack.c.b16 %v1295, %v1294
    %v1305 = vpack.c.b16 %v1297, %v1296
    %1314 = vmatprep.subr.bf16.mxu0 0
    %1315 = vmatpush1.bf16.msra.mxu0 %v1305
    %1316 = vmatprep.subr.bf16.mxu0 0
    %1317 = vmatpush1.bf16.msra.mxu0 %v1304
    %1318 = vmatprep.subr.bf16.mxu0 0
    %1319 = vmatpush1.bf16.msra.mxu0 %v1303
    %1320 = vmatprep.subr.bf16.mxu0 0
    %1321 = vmatpush1.bf16.msra.mxu0 %v1302
    %1322 = vmatprep.subr.bf16.mxu0 0
    %1323 = vmatpush1.bf16.msra.mxu0 %v1301
    %1324 = vmatprep.subr.bf16.mxu0 0
    %1325 = vmatpush1.bf16.msra.mxu0 %v1300
    %1326 = vmatprep.subr.bf16.mxu0 0
    %1327 = vmatpush1.bf16.msra.mxu0 %v1299
    %1328 = vmatprep.subr.bf16.mxu0 0
    %1329 = vmatpush1.bf16.msra.mxu0 %v1298
    %1330 = vmatprep.subr.bf16.mxu0 0
    %1331 = vmatpush2.bf16.msra.mxu0 0
    %1332 = vmatprep.subr.bf16.mxu0 0
    %1333 = vmatpush2.bf16.msra.mxu0 0
    %1334 = vmatprep.subr.bf16.mxu0 0
    %1335 = vmatpush2.bf16.msra.mxu0 0
    %1336 = vmatprep.subr.bf16.mxu0 0
    %1337 = vmatpush2.bf16.msra.mxu0 0
    %1338 = vmatprep.subr.bf16.mxu0 0
    %1339 = vmatpush2.bf16.msra.mxu0 0
    %1340 = vmatprep.subr.bf16.mxu0 0
    %1341 = vmatpush2.bf16.msra.mxu0 0
    %1342 = vmatprep.subr.bf16.mxu0 0
    %1343 = vmatpush2.bf16.msra.mxu0 0
    %1344 = vmatprep.subr.bf16.mxu0 0
    %1345 = vmatpush2.bf16.msra.mxu0 0
    %1346 = vmatprep.mubr.bf16.mxu0 0
    %1347 = vmatmul.mubr.bf16.gmra.mxu0 %v1234
    %v1348 = vpop.f32.mrf.mxu0
    %v1349 = vadd.f32 %v1264, %v1348
    %v1350 = vpop.f32.mrf.mxu0
    %v1351 = vpop.f32.mrf.mxu0
    %v1352 = vadd.f32 %v1264, %v1351
    %v1353 = vpop.f32.mrf.mxu0
    %1354 = vmatprep.mubr.bf16.mxu0 0
    %1355 = vmatmul.mubr.bf16.gmra.mxu0 %v1235
    %v1356 = vpop.f32.mrf.mxu0
    %v1357 = vadd.f32 %v1264, %v1356
    %v1358 = vpop.f32.mrf.mxu0
    %v1359 = vpop.f32.mrf.mxu0
    %v1360 = vadd.f32 %v1264, %v1359
    %v1361 = vpop.f32.mrf.mxu0
    %1362 = vmatprep.mubr.bf16.mxu0 0
    %1363 = vmatmul.mubr.bf16.gmra.mxu0 %v1236
    %v1364 = vpop.f32.mrf.mxu0
    %v1365 = vadd.f32 %v1264, %v1364
    %v1366 = vpop.f32.mrf.mxu0
    %v1367 = vpop.f32.mrf.mxu0
    %v1368 = vadd.f32 %v1264, %v1367
    %v1369 = vpop.f32.mrf.mxu0
    %1370 = vmatprep.mubr.bf16.mxu0 0
    %1371 = vmatmul.mubr.bf16.gmra.mxu0 %v1237
    %v1372 = vpop.f32.mrf.mxu0
    %v1373 = vadd.f32 %v1264, %v1372
    %v1374 = vpop.f32.mrf.mxu0
    %v1375 = vpop.f32.mrf.mxu0
    %v1376 = vadd.f32 %v1264, %v1375
    %v1377 = vpop.f32.mrf.mxu0
    %1378 = vmatprep.mubr.bf16.mxu0 0
    %1379 = vmatmul.mubr.bf16.gmra.mxu0 %v1238
    %v1380 = vpop.f32.mrf.mxu0
    %v1381 = vadd.f32 %v1264, %v1380
    %v1382 = vpop.f32.mrf.mxu0
    %v1383 = vpop.f32.mrf.mxu0
    %v1384 = vadd.f32 %v1264, %v1383
    %v1385 = vpop.f32.mrf.mxu0
    %1386 = vmatprep.mubr.bf16.mxu0 0
    %1387 = vmatmul.mubr.bf16.gmra.mxu0 %v1239
    %v1388 = vpop.f32.mrf.mxu0
    %v1389 = vadd.f32 %v1264, %v1388
    %v1390 = vpop.f32.mrf.mxu0
    %v1391 = vpop.f32.mrf.mxu0
    %v1392 = vadd.f32 %v1264, %v1391
    %v1393 = vpop.f32.mrf.mxu0
    %1394 = vmatprep.mubr.bf16.mxu0 0
    %1395 = vmatmul.mubr.bf16.gmra.mxu0 %v1240
    %v1396 = vpop.f32.mrf.mxu0
    %v1397 = vadd.f32 %v1264, %v1396
    %v1398 = vpop.f32.mrf.mxu0
    %v1399 = vpop.f32.mrf.mxu0
    %v1400 = vadd.f32 %v1264, %v1399
    %v1401 = vpop.f32.mrf.mxu0
    %1402 = vmatprep.mubr.bf16.mxu0 0
    %1403 = vmatmul.mubr.bf16.gmra.mxu0 %v1241
    %v1404 = vpop.f32.mrf.mxu0
    %v1405 = vadd.f32 %v1264, %v1404
    %v1406 = vpop.f32.mrf.mxu0
    %v1407 = vpop.f32.mrf.mxu0
    %v1408 = vadd.f32 %v1264, %v1407
    %v1409 = vpop.f32.mrf.mxu0
    %1410 = vdwg.mxu0
    %v1411 = vmax.f32 %v1349, 0.0
    %v1412 = vmax.f32 %v1352, 0.0
    %v1413 = vmax.f32 %v1357, 0.0
    %v1414 = vmax.f32 %v1360, 0.0
    %v1415 = vmax.f32 %v1365, 0.0
    %v1416 = vmax.f32 %v1368, 0.0
    %v1417 = vmax.f32 %v1373, 0.0
    %v1418 = vmax.f32 %v1376, 0.0
    %v1419 = vmax.f32 %v1381, 0.0
    %v1420 = vmax.f32 %v1384, 0.0
    %v1421 = vmax.f32 %v1389, 0.0
    %v1422 = vmax.f32 %v1392, 0.0
    %v1423 = vmax.f32 %v1397, 0.0
    %v1424 = vmax.f32 %v1400, 0.0
    %v1425 = vmax.f32 %v1405, 0.0
    %v1426 = vmax.f32 %v1408, 0.0
    %v1427 = vpack.c.bf16 %v1412, %v1411
    %v1428 = vpack.c.bf16 %v1414, %v1413
    %v1429 = vpack.c.bf16 %v1416, %v1415
    %v1430 = vpack.c.bf16 %v1418, %v1417
    %v1431 = vpack.c.bf16 %v1420, %v1419
    %v1432 = vpack.c.bf16 %v1422, %v1421
    %v1433 = vpack.c.bf16 %v1424, %v1423
    %v1434 = vpack.c.bf16 %v1426, %v1425
    %s1435 = scalar_lea.vmem [#allocation2], 128
    %v1436 = vld [vmem:[%s1435] sm:$0xf]
    %v1437 = vld [vmem:[%s1435 + $0x4] sm:$0xf]
    %v1438 = vld [vmem:[%s1435 + $0x8] sm:$0xf]
    %v1439 = vld [vmem:[%s1435 + $0xc] sm:$0xf]
    %v1440 = vld [vmem:[%s1435 + $0x10] sm:$0xf]
    %v1441 = vld [vmem:[%s1435 + $0x14] sm:$0xf]
    %v1442 = vld [vmem:[%s1435 + $0x18] sm:$0xf]
    %v1443 = vld [vmem:[%s1435 + $0x1c] sm:$0xf]
    %v1444 = vld [vmem:[%s1435 + $0x20] sm:$0xf]
    %v1445 = vld [vmem:[%s1435 + $0x24] sm:$0xf]
    %v1446 = vld [vmem:[%s1435 + $0x28] sm:$0xf]
    %v1447 = vld [vmem:[%s1435 + $0x2c] sm:$0xf]
    %v1448 = vld [vmem:[%s1435 + $0x30] sm:$0xf]
    %v1449 = vld [vmem:[%s1435 + $0x34] sm:$0xf]
    %v1450 = vld [vmem:[%s1435 + $0x38] sm:$0xf]
    %v1451 = vld [vmem:[%s1435 + $0x3c] sm:$0xf]
    %v1452 = vld [vmem:[#allocation4 + $0x5] sm:$0x1]
    %v1454 = vlaneseq
    %v1455 = vshrl.u32 %v1454, 7
    %v1456 = vsub.s32 0, %v1455
    %v1457 = vrot.slane %v1452, %v1456
    %v1475 = vunpack.c.l.b16 %v1436
    %v1476 = vunpack.c.l.b16 %v1437
    %v1477 = vunpack.c.l.b16 %v1438
    %v1478 = vunpack.c.l.b16 %v1439
    %v1479 = vunpack.c.l.b16 %v1440
    %v1480 = vunpack.c.l.b16 %v1441
    %v1481 = vunpack.c.l.b16 %v1442
    %v1482 = vunpack.c.l.b16 %v1443
    %v1483 = vunpack.c.l.b16 %v1444
    %v1484 = vunpack.c.l.b16 %v1445
    %v1485 = vunpack.c.l.b16 %v1446
    %v1486 = vunpack.c.l.b16 %v1447
    %v1487 = vunpack.c.l.b16 %v1448
    %v1488 = vunpack.c.l.b16 %v1449
    %v1489 = vunpack.c.l.b16 %v1450
    %v1490 = vunpack.c.l.b16 %v1451
    %v1491 = vpack.c.b16 %v1476, %v1475
    %v1492 = vpack.c.b16 %v1478, %v1477
    %v1493 = vpack.c.b16 %v1480, %v1479
    %v1494 = vpack.c.b16 %v1482, %v1481
    %v1495 = vpack.c.b16 %v1484, %v1483
    %v1496 = vpack.c.b16 %v1486, %v1485
    %v1497 = vpack.c.b16 %v1488, %v1487
    %v1498 = vpack.c.b16 %v1490, %v1489
    %1507 = vmatprep.subr.bf16.mxu0 0
    %1508 = vmatpush1.bf16.msra.mxu0 %v1498
    %1509 = vmatprep.subr.bf16.mxu0 0
    %1510 = vmatpush1.bf16.msra.mxu0 %v1497
    %1511 = vmatprep.subr.bf16.mxu0 0
    %1512 = vmatpush1.bf16.msra.mxu0 %v1496
    %1513 = vmatprep.subr.bf16.mxu0 0
    %1514 = vmatpush1.bf16.msra.mxu0 %v1495
    %1515 = vmatprep.subr.bf16.mxu0 0
    %1516 = vmatpush1.bf16.msra.mxu0 %v1494
    %1517 = vmatprep.subr.bf16.mxu0 0
    %1518 = vmatpush1.bf16.msra.mxu0 %v1493
    %1519 = vmatprep.subr.bf16.mxu0 0
    %1520 = vmatpush1.bf16.msra.mxu0 %v1492
    %1521 = vmatprep.subr.bf16.mxu0 0
    %1522 = vmatpush1.bf16.msra.mxu0 %v1491
    %1523 = vmatprep.subr.bf16.mxu0 0
    %1524 = vmatpush2.bf16.msra.mxu0 0
    %1525 = vmatprep.subr.bf16.mxu0 0
    %1526 = vmatpush2.bf16.msra.mxu0 0
    %1527 = vmatprep.subr.bf16.mxu0 0
    %1528 = vmatpush2.bf16.msra.mxu0 0
    %1529 = vmatprep.subr.bf16.mxu0 0
    %1530 = vmatpush2.bf16.msra.mxu0 0
    %1531 = vmatprep.subr.bf16.mxu0 0
    %1532 = vmatpush2.bf16.msra.mxu0 0
    %1533 = vmatprep.subr.bf16.mxu0 0
    %1534 = vmatpush2.bf16.msra.mxu0 0
    %1535 = vmatprep.subr.bf16.mxu0 0
    %1536 = vmatpush2.bf16.msra.mxu0 0
    %1537 = vmatprep.subr.bf16.mxu0 0
    %1538 = vmatpush2.bf16.msra.mxu0 0
    %1539 = vmatprep.mubr.bf16.mxu0 0
    %1540 = vmatmul.mubr.bf16.gmra.mxu0 %v1427
    %v1541 = vpop.f32.mrf.mxu0
    %v1542 = vadd.f32 %v1457, %v1541
    %v1543 = vpop.f32.mrf.mxu0
    %v1544 = vpop.f32.mrf.mxu0
    %v1545 = vadd.f32 %v1457, %v1544
    %v1546 = vpop.f32.mrf.mxu0
    %1547 = vmatprep.mubr.bf16.mxu0 0
    %1548 = vmatmul.mubr.bf16.gmra.mxu0 %v1428
    %v1549 = vpop.f32.mrf.mxu0
    %v1550 = vadd.f32 %v1457, %v1549
    %v1551 = vpop.f32.mrf.mxu0
    %v1552 = vpop.f32.mrf.mxu0
    %v1553 = vadd.f32 %v1457, %v1552
    %v1554 = vpop.f32.mrf.mxu0
    %1555 = vmatprep.mubr.bf16.mxu0 0
    %1556 = vmatmul.mubr.bf16.gmra.mxu0 %v1429
    %v1557 = vpop.f32.mrf.mxu0
    %v1558 = vadd.f32 %v1457, %v1557
    %v1559 = vpop.f32.mrf.mxu0
    %v1560 = vpop.f32.mrf.mxu0
    %v1561 = vadd.f32 %v1457, %v1560
    %v1562 = vpop.f32.mrf.mxu0
    %1563 = vmatprep.mubr.bf16.mxu0 0
    %1564 = vmatmul.mubr.bf16.gmra.mxu0 %v1430
    %v1565 = vpop.f32.mrf.mxu0
    %v1566 = vadd.f32 %v1457, %v1565
    %v1567 = vpop.f32.mrf.mxu0
    %v1568 = vpop.f32.mrf.mxu0
    %v1569 = vadd.f32 %v1457, %v1568
    %v1570 = vpop.f32.mrf.mxu0
    %1571 = vmatprep.mubr.bf16.mxu0 0
    %1572 = vmatmul.mubr.bf16.gmra.mxu0 %v1431
    %v1573 = vpop.f32.mrf.mxu0
    %v1574 = vadd.f32 %v1457, %v1573
    %v1575 = vpop.f32.mrf.mxu0
    %v1576 = vpop.f32.mrf.mxu0
    %v1577 = vadd.f32 %v1457, %v1576
    %v1578 = vpop.f32.mrf.mxu0
    %1579 = vmatprep.mubr.bf16.mxu0 0
    %1580 = vmatmul.mubr.bf16.gmra.mxu0 %v1432
    %v1581 = vpop.f32.mrf.mxu0
    %v1582 = vadd.f32 %v1457, %v1581
    %v1583 = vpop.f32.mrf.mxu0
    %v1584 = vpop.f32.mrf.mxu0
    %v1585 = vadd.f32 %v1457, %v1584
    %v1586 = vpop.f32.mrf.mxu0
    %1587 = vmatprep.mubr.bf16.mxu0 0
    %1588 = vmatmul.mubr.bf16.gmra.mxu0 %v1433
    %v1589 = vpop.f32.mrf.mxu0
    %v1590 = vadd.f32 %v1457, %v1589
    %v1591 = vpop.f32.mrf.mxu0
    %v1592 = vpop.f32.mrf.mxu0
    %v1593 = vadd.f32 %v1457, %v1592
    %v1594 = vpop.f32.mrf.mxu0
    %1595 = vmatprep.mubr.bf16.mxu0 0
    %1596 = vmatmul.mubr.bf16.gmra.mxu0 %v1434
    %v1597 = vpop.f32.mrf.mxu0
    %v1598 = vadd.f32 %v1457, %v1597
    %v1599 = vpop.f32.mrf.mxu0
    %v1600 = vpop.f32.mrf.mxu0
    %v1601 = vadd.f32 %v1457, %v1600
    %v1602 = vpop.f32.mrf.mxu0
    %1603 = vdwg.mxu0
    %v1604 = vmax.f32 %v1542, 0.0
    %v1605 = vmax.f32 %v1545, 0.0
    %v1606 = vmax.f32 %v1550, 0.0
    %v1607 = vmax.f32 %v1553, 0.0
    %v1608 = vmax.f32 %v1558, 0.0
    %v1609 = vmax.f32 %v1561, 0.0
    %v1610 = vmax.f32 %v1566, 0.0
    %v1611 = vmax.f32 %v1569, 0.0
    %v1612 = vmax.f32 %v1574, 0.0
    %v1613 = vmax.f32 %v1577, 0.0
    %v1614 = vmax.f32 %v1582, 0.0
    %v1615 = vmax.f32 %v1585, 0.0
    %v1616 = vmax.f32 %v1590, 0.0
    %v1617 = vmax.f32 %v1593, 0.0
    %v1618 = vmax.f32 %v1598, 0.0
    %v1619 = vmax.f32 %v1601, 0.0
    %v1620 = vld [vmem:[%s2] sm:$0xf]
    %v1621 = vpack.c.bf16 %v1605, %v1604
    %v1622 = vpack.c.bf16 %v1607, %v1606
    %v1623 = vpack.c.bf16 %v1609, %v1608
    %v1624 = vpack.c.bf16 %v1611, %v1610
    %v1625 = vpack.c.bf16 %v1613, %v1612
    %v1626 = vpack.c.bf16 %v1615, %v1614
    %v1627 = vpack.c.bf16 %v1617, %v1616
    %v1628 = vpack.c.bf16 %v1619, %v1618
    %1629 = vmatprep.subr.bf16.mxu0 0
    %1630 = vmatpush1.bf16.msra.mxu0 %v1628
    %1631 = vmatprep.subr.bf16.mxu0 0
    %1632 = vmatpush1.bf16.msra.mxu0 %v1627
    %1633 = vmatprep.subr.bf16.mxu0 0
    %1634 = vmatpush1.bf16.msra.mxu0 %v1626
    %1635 = vmatprep.subr.bf16.mxu0 0
    %1636 = vmatpush1.bf16.msra.mxu0 %v1625
    %1637 = vmatprep.subr.bf16.mxu0 0
    %1638 = vmatpush1.bf16.msra.mxu0 %v1624
    %1639 = vmatprep.subr.bf16.mxu0 0
    %1640 = vmatpush1.bf16.msra.mxu0 %v1623
    %1641 = vmatprep.subr.bf16.mxu0 0
    %1642 = vmatpush1.bf16.msra.mxu0 %v1622
    %1643 = vmatprep.subr.bf16.mxu0 0
    %1644 = vmatpush1.bf16.msra.mxu0 %v1621
    %1645 = vmatprep.subr.bf16.mxu0 0
    %1646 = vmatpush2.bf16.msra.mxu0 0
    %1647 = vmatprep.subr.bf16.mxu0 0
    %1648 = vmatpush2.bf16.msra.mxu0 0
    %1649 = vmatprep.subr.bf16.mxu0 0
    %1650 = vmatpush2.bf16.msra.mxu0 0
    %1651 = vmatprep.subr.bf16.mxu0 0
    %1652 = vmatpush2.bf16.msra.mxu0 0
    %1653 = vmatprep.subr.bf16.mxu0 0
    %1654 = vmatpush2.bf16.msra.mxu0 0
    %1655 = vmatprep.subr.bf16.mxu0 0
    %1656 = vmatpush2.bf16.msra.mxu0 0
    %1657 = vmatprep.subr.bf16.mxu0 0
    %1658 = vmatpush2.bf16.msra.mxu0 0
    %1659 = vmatprep.subr.bf16.mxu0 0
    %1660 = vmatpush2.bf16.msra.mxu0 0
    %1661 = vmatprep.mubr.bf16.mxu0 0
    %1662 = vmatmul.mubr.bf16.gmra.mxu0 %v1620
    %v1663 = vpop.f32.mrf.mxu0
    %v1664 = vadd.f32 0.0, %v1663
    %v1665 = vpop.f32.mrf.mxu0
    %v1666 = vpop.f32.mrf.mxu0
    %v1667 = vpop.f32.mrf.mxu0
    %1668 = vdwg.mxu0
    %v1669 = vld [vmem:[#allocation4 + $0x6] sm:$0x1]
    %v1670 = vld [vmem:[#allocation4 + $0x7] sm:$0x1]
    %v1671 = vld [vmem:[#allocation4 + $0x8] sm:$0x1]
    %v1672 = vld [vmem:[#allocation4 + $0x9] sm:$0x1]
    %v1673 = vld [vmem:[#allocation4 + $0xa] sm:$0x1]
    %1674 = vadd.xlane.f32.xlu0 %v1664
    %v1675 = vpop.xlane.xlu0 %1674
    %v1676 = vmul.f32 %v1675, 0.015625
    %v1677 = vmul.f32 %v1664, %v1664
    %1678 = vadd.xlane.f32.xlu0 %v1677
    %v1679 = vpop.xlane.xlu0 %1678
    %v1680 = vmul.f32 %v1679, 0.015625
    %v1681 = vmul.f32 %v1676, %v1676
    %v1682 = vsub.f32 %v1680, %v1681
    %v1683 = vmax.f32 %v1682, 0.0
    %v1684 = vsub.f32 %v1664, %v1676
    %v1685 = vadd.f32 %v1683, 1e-05
    %v1686 = vrsqrt.pop %v1685
    %v1687 = vmul.f32 %v1684, %v1686
    %v1689 = vlaneseq
    %v1690 = vshrl.u32 %v1689, 7
    %v1691 = vsub.s32 0, %v1690
    %v1692 = vrot.slane %v1669, %v1691
    %v1694 = vmul.f32 %v1687, %v1692
    %v1696 = vlaneseq
    %v1697 = vshrl.u32 %v1696, 7
    %v1698 = vsub.s32 0, %v1697
    %v1699 = vrot.slane %v1670, %v1698
    %v1701 = vadd.f32 %v1694, %v1699
    %v1703 = vlaneseq
    %v1704 = vshrl.u32 %v1703, 7
    %v1705 = vsub.s32 0, %v1704
    %v1706 = vrot.slane %v1671, %v1705
    %v1708 = vadd.f32 %v1706, %v1701
    %v1709 = vpack.c.bf16 %v1708, %v1708
    %v1710 = vld [vmem:[%s6] sm:$0xf]
    %v1711 = vld [vmem:[%s6 + $0x4] sm:$0xf]
    %v1712 = vld [vmem:[%s6 + $0x8] sm:$0xf]
    %v1713 = vld [vmem:[%s6 + $0xc] sm:$0xf]
    %v1714 = vld [vmem:[%s6 + $0x10] sm:$0xf]
    %v1715 = vld [vmem:[%s6 + $0x14] sm:$0xf]
    %v1716 = vld [vmem:[%s6 + $0x18] sm:$0xf]
    %v1717 = vld [vmem:[%s6 + $0x1c] sm:$0xf]
    %v1718 = vld [vmem:[%s6 + $0x20] sm:$0xf]
    %v1719 = vld [vmem:[%s6 + $0x24] sm:$0xf]
    %v1720 = vld [vmem:[%s6 + $0x28] sm:$0xf]
    %v1721 = vld [vmem:[%s6 + $0x2c] sm:$0xf]
    %v1722 = vld [vmem:[%s6 + $0x30] sm:$0xf]
    %v1723 = vld [vmem:[%s6 + $0x34] sm:$0xf]
    %v1724 = vld [vmem:[%s6 + $0x38] sm:$0xf]
    %v1725 = vld [vmem:[%s6 + $0x3c] sm:$0xf]
    %v1727 = vlaneseq
    %v1728 = vshrl.u32 %v1727, 7
    %v1729 = vsub.s32 0, %v1728
    %v1730 = vrot.slane %v1672, %v1729
    %v1748 = vunpack.c.l.b16 %v1710
    %v1749 = vunpack.c.l.b16 %v1711
    %v1750 = vunpack.c.l.b16 %v1712
    %v1751 = vunpack.c.l.b16 %v1713
    %v1752 = vunpack.c.l.b16 %v1714
    %v1753 = vunpack.c.l.b16 %v1715
    %v1754 = vunpack.c.l.b16 %v1716
    %v1755 = vunpack.c.l.b16 %v1717
    %v1756 = vunpack.c.l.b16 %v1718
    %v1757 = vunpack.c.l.b16 %v1719
    %v1758 = vunpack.c.l.b16 %v1720
    %v1759 = vunpack.c.l.b16 %v1721
    %v1760 = vunpack.c.l.b16 %v1722
    %v1761 = vunpack.c.l.b16 %v1723
    %v1762 = vunpack.c.l.b16 %v1724
    %v1763 = vunpack.c.l.b16 %v1725
    %v1764 = vpack.c.b16 %v1749, %v1748
    %v1765 = vpack.c.b16 %v1751, %v1750
    %v1766 = vpack.c.b16 %v1753, %v1752
    %v1767 = vpack.c.b16 %v1755, %v1754
    %v1768 = vpack.c.b16 %v1757, %v1756
    %v1769 = vpack.c.b16 %v1759, %v1758
    %v1770 = vpack.c.b16 %v1761, %v1760
    %v1771 = vpack.c.b16 %v1763, %v1762
    %1780 = vmatprep.subr.bf16.mxu0 0
    %1781 = vmatpush1.bf16.msra.mxu0 %v1771
    %1782 = vmatprep.subr.bf16.mxu0 0
    %1783 = vmatpush1.bf16.msra.mxu0 %v1770
    %1784 = vmatprep.subr.bf16.mxu0 0
    %1785 = vmatpush1.bf16.msra.mxu0 %v1769
    %1786 = vmatprep.subr.bf16.mxu0 0
    %1787 = vmatpush1.bf16.msra.mxu0 %v1768
    %1788 = vmatprep.subr.bf16.mxu0 0
    %1789 = vmatpush1.bf16.msra.mxu0 %v1767
    %1790 = vmatprep.subr.bf16.mxu0 0
    %1791 = vmatpush1.bf16.msra.mxu0 %v1766
    %1792 = vmatprep.subr.bf16.mxu0 0
    %1793 = vmatpush1.bf16.msra.mxu0 %v1765
    %1794 = vmatprep.subr.bf16.mxu0 0
    %1795 = vmatpush1.bf16.msra.mxu0 %v1764
    %1796 = vmatprep.subr.bf16.mxu0 0
    %1797 = vmatpush2.bf16.msra.mxu0 0
    %1798 = vmatprep.subr.bf16.mxu0 0
    %1799 = vmatpush2.bf16.msra.mxu0 0
    %1800 = vmatprep.subr.bf16.mxu0 0
    %1801 = vmatpush2.bf16.msra.mxu0 0
    %1802 = vmatprep.subr.bf16.mxu0 0
    %1803 = vmatpush2.bf16.msra.mxu0 0
    %1804 = vmatprep.subr.bf16.mxu0 0
    %1805 = vmatpush2.bf16.msra.mxu0 0
    %1806 = vmatprep.subr.bf16.mxu0 0
    %1807 = vmatpush2.bf16.msra.mxu0 0
    %1808 = vmatprep.subr.bf16.mxu0 0
    %1809 = vmatpush2.bf16.msra.mxu0 0
    %1810 = vmatprep.subr.bf16.mxu0 0
    %1811 = vmatpush2.bf16.msra.mxu0 0
    %1812 = vmatprep.mubr.bf16.mxu0 0
    %1813 = vmatmul.mubr.bf16.gmra.mxu0 %v1709
    %v1814 = vpop.f32.mrf.mxu0
    %v1815 = vadd.f32 %v1730, %v1814
    %v1816 = vpop.f32.mrf.mxu0
    %v1817 = vpop.f32.mrf.mxu0
    %v1818 = vpop.f32.mrf.mxu0
    %1819 = vdwg.mxu0
    %v1820 = vmax.f32 %v1815, 0.0
    %v1821 = vpack.c.bf16 %v1820, %v1820
    %v1822 = vld [vmem:[#allocation6] sm:$0xf]
    %v1823 = vld [vmem:[#allocation6 + $0x4] sm:$0xf]
    %v1824 = vld [vmem:[#allocation6 + $0x8] sm:$0xf]
    %v1825 = vld [vmem:[#allocation6 + $0xc] sm:$0xf]
    %v1826 = vld [vmem:[#allocation6 + $0x10] sm:$0xf]
    %v1827 = vld [vmem:[#allocation6 + $0x14] sm:$0xf]
    %v1828 = vld [vmem:[#allocation6 + $0x18] sm:$0xf]
    %v1829 = vld [vmem:[#allocation6 + $0x1c] sm:$0xf]
    %v1830 = vld [vmem:[#allocation6 + $0x20] sm:$0xf]
    %v1831 = vld [vmem:[#allocation6 + $0x24] sm:$0xf]
    %v1832 = vld [vmem:[#allocation6 + $0x28] sm:$0xf]
    %v1833 = vld [vmem:[#allocation6 + $0x2c] sm:$0xf]
    %v1834 = vld [vmem:[#allocation6 + $0x30] sm:$0xf]
    %v1835 = vld [vmem:[#allocation6 + $0x34] sm:$0xf]
    %v1836 = vld [vmem:[#allocation6 + $0x38] sm:$0xf]
    %v1837 = vld [vmem:[#allocation6 + $0x3c] sm:$0xf]
    %v1839 = vlaneseq
    %v1840 = vshrl.u32 %v1839, 7
    %v1841 = vsub.s32 0, %v1840
    %v1842 = vrot.slane %v1673, %v1841
    %v1860 = vunpack.c.l.b16 %v1822
    %v1861 = vunpack.c.l.b16 %v1823
    %v1862 = vunpack.c.l.b16 %v1824
    %v1863 = vunpack.c.l.b16 %v1825
    %v1864 = vunpack.c.l.b16 %v1826
    %v1865 = vunpack.c.l.b16 %v1827
    %v1866 = vunpack.c.l.b16 %v1828
    %v1867 = vunpack.c.l.b16 %v1829
    %v1868 = vunpack.c.l.b16 %v1830
    %v1869 = vunpack.c.l.b16 %v1831
    %v1870 = vunpack.c.l.b16 %v1832
    %v1871 = vunpack.c.l.b16 %v1833
    %v1872 = vunpack.c.l.b16 %v1834
    %v1873 = vunpack.c.l.b16 %v1835
    %v1874 = vunpack.c.l.b16 %v1836
    %v1875 = vunpack.c.l.b16 %v1837
    %v1876 = vpack.c.b16 %v1861, %v1860
    %v1877 = vpack.c.b16 %v1863, %v1862
    %v1878 = vpack.c.b16 %v1865, %v1864
    %v1879 = vpack.c.b16 %v1867, %v1866
    %v1880 = vpack.c.b16 %v1869, %v1868
    %v1881 = vpack.c.b16 %v1871, %v1870
    %v1882 = vpack.c.b16 %v1873, %v1872
    %v1883 = vpack.c.b16 %v1875, %v1874
    %1892 = vmatprep.subr.bf16.mxu0 0
    %1893 = vmatpush1.bf16.msra.mxu0 %v1883
    %1894 = vmatprep.subr.bf16.mxu0 0
    %1895 = vmatpush1.bf16.msra.mxu0 %v1882
    %1896 = vmatprep.subr.bf16.mxu0 0
    %1897 = vmatpush1.bf16.msra.mxu0 %v1881
    %1898 = vmatprep.subr.bf16.mxu0 0
    %1899 = vmatpush1.bf16.msra.mxu0 %v1880
    %1900 = vmatprep.subr.bf16.mxu0 0
    %1901 = vmatpush1.bf16.msra.mxu0 %v1879
    %1902 = vmatprep.subr.bf16.mxu0 0
    %1903 = vmatpush1.bf16.msra.mxu0 %v1878
    %1904 = vmatprep.subr.bf16.mxu0 0
    %1905 = vmatpush1.bf16.msra.mxu0 %v1877
    %1906 = vmatprep.subr.bf16.mxu0 0
    %1907 = vmatpush1.bf16.msra.mxu0 %v1876
    %1908 = vmatprep.subr.bf16.mxu0 0
    %1909 = vmatpush2.bf16.msra.mxu0 0
    %1910 = vmatprep.subr.bf16.mxu0 0
    %1911 = vmatpush2.bf16.msra.mxu0 0
    %1912 = vmatprep.subr.bf16.mxu0 0
    %1913 = vmatpush2.bf16.msra.mxu0 0
    %1914 = vmatprep.subr.bf16.mxu0 0
    %1915 = vmatpush2.bf16.msra.mxu0 0
    %1916 = vmatprep.subr.bf16.mxu0 0
    %1917 = vmatpush2.bf16.msra.mxu0 0
    %1918 = vmatprep.subr.bf16.mxu0 0
    %1919 = vmatpush2.bf16.msra.mxu0 0
    %1920 = vmatprep.subr.bf16.mxu0 0
    %1921 = vmatpush2.bf16.msra.mxu0 0
    %1922 = vmatprep.subr.bf16.mxu0 0
    %1923 = vmatpush2.bf16.msra.mxu0 0
    %1924 = vmatprep.mubr.bf16.mxu0 0
    %1925 = vmatmul.mubr.bf16.gmra.mxu0 %v1821
    %v1926 = vpop.f32.mrf.mxu0
    %v1927 = vadd.f32 %v1842, %v1926
    %v1928 = vpop.f32.mrf.mxu0
    %v1929 = vpop.f32.mrf.mxu0
    %v1930 = vpop.f32.mrf.mxu0
    %1931 = vdwg.mxu0
    %v1932 = vmax.f32 %v1927, 0.0
    %1933 = vst [vmem:[%s8] sm:$0xff] %v1932
    // Predicated region
    $region46: #{_forward_impl.1} parent=1 // pred_check
      _
    $region47: #{_forward_impl.1} parent=1 // pred_check_branch
      %1935 = sbr.rel (0) target = $region49
    $region48: #{_forward_impl.1} parent=1 // pred_region
      _
    $region49: #{_forward_impl.1} parent=1 // pred_fallthru
      _
    // Predicated region
    $region50: #{_forward_impl.1} parent=1 // pred_check
      _
    $region51: #{_forward_impl.1} parent=1 // pred_check_branch
      %1937 = sbr.rel (0) target = $region53
    $region52: #{_forward_impl.1} parent=1 // pred_region
      _
    $region53: #{_forward_impl.1} parent=1 // pred_fallthru
      _
    %1938 = vsyncpa [#allocation3], 1
    %1939 = vsyncpa [#allocation5], 1

</llo_original>
